<compile_context>
chip_gen: v7x
topology: tpu7x:2x2x1
jax: 0.10.0
libtpu: 0.0.40
codegen_flags: <defaults>
</compile_context>

<pallas_src>
import jax
import jax.numpy as jnp
from jax import lax
from jax.experimental import pallas as pl
from jax.experimental.pallas import tpu as pltpu


def pkt_kernel(fs_ref, ft_ref, w_ref, b_ref, pool_ref, kbig_ref, cb_ref, out_ref):
    fs = fs_ref[...]                          # (B*P, C) teacher, lane-dense
    ft = ft_ref[...]                          # (B*P, C) student
    C = fs.shape[1]

    ones_c = jnp.ones((C, 1), jnp.float32)    # channel reducer (feeds the MXU)
    inv_c = 1.0 / float(C)

    # ---- dist loss: per-pixel L2 over channels (channel reduce on the MXU) --
    diff = fs - ft
    pix_sq = jnp.dot(diff * diff, ones_c,
                     preferred_element_type=jnp.float32)        # (B*P, 1)
    dist_sum = jnp.sum(jnp.sqrt(pix_sq))

    # ---- channel loss: per-batch pixel means (pool matmul) -> Linear --------
    t_mean = jnp.dot(pool_ref[...], fs,
                     preferred_element_type=jnp.float32)        # (B, C)
    s_mean = jnp.dot(pool_ref[...], ft,
                     preferred_element_type=jnp.float32)        # (B, C)
    # nn.Linear: y = x @ W^T + b; weight consumed un-transposed (trans_b).
    s_adapt = lax.dot_general(s_mean, w_ref[...],
                              (((1,), (1,)), ((), ())),
                              preferred_element_type=jnp.float32) + b_ref[...]
    cd = t_mean - s_adapt
    ch_ss = jnp.sum(cd * cd)                                    # defer sqrt

    # ---- spatial loss: channel means -> 3x3 SAME conv as a single matmul ----
    t_sp = jnp.dot(fs, ones_c, preferred_element_type=jnp.float32) * inv_c  # (B*P, 1)
    s_sp = jnp.dot(ft, ones_c, preferred_element_type=jnp.float32) * inv_c  # (B*P, 1)
    conv = jnp.dot(kbig_ref[...], s_sp,
                   preferred_element_type=jnp.float32) + cb_ref[0]
    sd = t_sp - conv
    sp_ss = jnp.sum(sd * sd)                                    # defer sqrt

    total = 1e-4 * dist_sum + 0.2 * jnp.sqrt(ch_ss) + 0.02 * jnp.sqrt(sp_ss)
    out_ref[...] = jnp.full((1, 1), total, dtype=jnp.float32)


@jax.jit
def pkt_loss(f_s, f_t, lin_w, lin_b, conv_w, conv_b):
    """f_s, f_t: NCHW float32. lin_w: (C_out, C_in) as in PyTorch nn.Linear.
    conv_w: (1, 1, 3, 3), conv_b: (1,)."""
    B, C, H, W = f_s.shape
    P = H * W
    BP = B * P

    # Lane-dense (B*H*W, C) layout: one tiny NHWC transpose done by XLA.
    fs = jnp.transpose(f_s, (0, 2, 3, 1)).reshape(BP, C)
    ft = jnp.transpose(f_t, (0, 2, 3, 1)).reshape(BP, C)
    b_row = lin_b.reshape(1, C)

    # Static 3x3 SAME-conv band matrix: kmat[p_in, p_out] = k[dh+1, dw+1] when
    # the tap lands inside the image (zero padding otherwise).
    k = conv_w.reshape(3, 3).astype(jnp.float32)
    hh = jnp.arange(P, dtype=jnp.int32) // W
    ww = jnp.arange(P, dtype=jnp.int32) % W
    dh = hh[:, None] - hh[None, :]                 # rows: p_in, cols: p_out
    dw = ww[:, None] - ww[None, :]
    valid = (jnp.abs(dh) <= 1) & (jnp.abs(dw) <= 1)
    kmat = jnp.where(valid,
                     k[jnp.clip(dh + 1, 0, 2), jnp.clip(dw + 1, 0, 2)],
                     0.0)                                        # (P, P)
    # Batched conv operator acting on a (B*P, 1) column of channel means.
    kbig = jnp.kron(jnp.eye(B, dtype=jnp.float32), kmat.T)       # (BP, BP)

    # Per-batch pixel-mean pooling matrix: (B, BP) @ (BP, C) -> per-batch GAP.
    pool = jnp.kron(jnp.eye(B, dtype=jnp.float32),
                    jnp.full((1, P), 1.0 / P, dtype=jnp.float32))  # (B, BP)

    out = pl.pallas_call(
        pkt_kernel,
        out_shape=jax.ShapeDtypeStruct((1, 1), jnp.float32),
        grid=(1,),
        in_specs=[
            pl.BlockSpec((BP, C), lambda i: (0, 0)),             # teacher
            pl.BlockSpec((BP, C), lambda i: (0, 0)),             # student
            pl.BlockSpec((C, C), lambda i: (0, 0)),              # Linear weight
            pl.BlockSpec((1, C), lambda i: (0, 0)),              # Linear bias row
            pl.BlockSpec((B, BP), lambda i: (0, 0)),             # pixel-mean pool
            pl.BlockSpec((BP, BP), lambda i: (0, 0)),            # conv band matrix
            pl.BlockSpec(memory_space=pltpu.MemorySpace.SMEM),   # conv bias (1,)
        ],
        out_specs=pl.BlockSpec((1, 1), lambda i: (0, 0)),
        compiler_params=pltpu.CompilerParams(
            dimension_semantics=("arbitrary",)),
    )(fs, ft, lin_w, b_row, pool, kbig, conv_b)
    return out[0, 0]


def pkt_loss_ref(f_s, f_t, lin_w, lin_b, conv_w, conv_b):
    """Pure-JAX reference matching the PyTorch module semantics (NCHW)."""
    diff = f_s - f_t
    dist_loss = 1e-4 * jnp.sum(jnp.sqrt(jnp.sum(diff * diff, axis=1)))
    t_mean = jnp.mean(f_s, axis=(2, 3))
    s_mean = jnp.mean(f_t, axis=(2, 3))
    s_adapt = jnp.dot(s_mean, lin_w.T, precision=lax.Precision.HIGHEST) + lin_b
    kd_channel = 0.2 * jnp.sqrt(jnp.sum((t_mean - s_adapt) ** 2))
    t_sp = jnp.mean(f_s, axis=1, keepdims=True)
    s_sp = jnp.mean(f_t, axis=1, keepdims=True)
    conv = lax.conv_general_dilated(
        s_sp, conv_w, window_strides=(1, 1), padding="SAME",
        dimension_numbers=("NCHW", "OIHW", "NCHW"),
        precision=lax.Precision.HIGHEST) + conv_b.reshape(1, 1, 1, 1)
    kd_spatial = 0.02 * jnp.sqrt(jnp.sum((t_sp - conv) ** 2))
    return dist_loss + kd_channel + kd_spatial


if __name__ == "__main__":
    key = jax.random.PRNGKey(0)
    k1, k2, k3, k4, k5, k6 = jax.random.split(key, 6)

    # Channel count is fixed to 256 by nn.Linear(256, 256) in the module.
    B, C, H, W = 2, 256, 8, 8
    f_s = jax.random.normal(k1, (B, C, H, W), dtype=jnp.float32)
    f_t = jax.random.normal(k2, (B, C, H, W), dtype=jnp.float32)

    # Deterministic parameter init (PyTorch-like uniform fan-in scaling).
    lin_bound = 1.0 / jnp.sqrt(256.0)
    lin_w = jax.random.uniform(k3, (256, 256), jnp.float32, -lin_bound, lin_bound)
    lin_b = jax.random.uniform(k4, (256,), jnp.float32, -lin_bound, lin_bound)
    conv_bound = 1.0 / 3.0
    conv_w = jax.random.uniform(k5, (1, 1, 3, 3), jnp.float32, -conv_bound, conv_bound)
    conv_b = jax.random.uniform(k6, (1,), jnp.float32, -conv_bound, conv_bound)

    out = jax.block_until_ready(pkt_loss(f_s, f_t, lin_w, lin_b, conv_w, conv_b))
    ref = jax.block_until_ready(pkt_loss_ref(f_s, f_t, lin_w, lin_b, conv_w, conv_b))

    assert jnp.isfinite(out), "kernel produced non-finite loss"
    assert jnp.allclose(out, ref, rtol=1e-2, atol=1e-3), (out, ref)

    print("KERNEL_OK")
</pallas_src>

<mosaic_0001>
module attributes {stable_mosaic.version = 11 : i64} {
  func.func @pkt_kernel(%arg0: i32, %arg1: memref<128x256xf32, #tpu.memory_space<vmem>>, %arg2: memref<128x256xf32, #tpu.memory_space<vmem>>, %arg3: memref<256x256xf32, #tpu.memory_space<vmem>>, %arg4: memref<1x256xf32, #tpu.memory_space<vmem>>, %arg5: memref<2x128xf32, #tpu.memory_space<vmem>>, %arg6: memref<128x128xf32, #tpu.memory_space<vmem>>, %arg7: memref<1xf32, #tpu.memory_space<smem>>, %arg8: memref<1x1xf32, #tpu.memory_space<vmem>>) attributes {dimension_semantics = [#tpu.dimension_semantics<arbitrary>], iteration_bounds = array<i64: 1>, scalar_prefetch = 0 : i64, scratch_operands = 0 : i64, tpu.core_type = #tpu.core_type<tc>, window_params = [{pipeline_mode = #tpu.pipeline_mode<synchronous>, transform_indices = @transform_0, window_bounds = array<i64: 128, 256>}, {pipeline_mode = #tpu.pipeline_mode<synchronous>, transform_indices = @transform_1, window_bounds = array<i64: 128, 256>}, {pipeline_mode = #tpu.pipeline_mode<synchronous>, transform_indices = @transform_2, window_bounds = array<i64: 256, 256>}, {pipeline_mode = #tpu.pipeline_mode<synchronous>, transform_indices = @transform_3, window_bounds = array<i64: 1, 256>}, {pipeline_mode = #tpu.pipeline_mode<synchronous>, transform_indices = @transform_4, window_bounds = array<i64: 2, 128>}, {pipeline_mode = #tpu.pipeline_mode<synchronous>, transform_indices = @transform_5, window_bounds = array<i64: 128, 128>}, {transform_indices = @transform_6, window_bounds = array<i64: 1>}, {pipeline_mode = #tpu.pipeline_mode<synchronous>, transform_indices = @transform_7, window_bounds = array<i64: 1, 1>}]} {
    %c0 = arith.constant 0 : index
    %c0_0 = arith.constant 0 : index
    %0 = vector.load %arg1[%c0, %c0_0] : memref<128x256xf32, #tpu.memory_space<vmem>>, vector<128x256xf32>
    %c0_1 = arith.constant 0 : index
    %c0_2 = arith.constant 0 : index
    %1 = vector.load %arg2[%c0_1, %c0_2] : memref<128x256xf32, #tpu.memory_space<vmem>>, vector<128x256xf32>
    %cst = arith.constant 1.000000e+00 : f32
    %2 = vector.broadcast %cst : f32 to vector<256x1xf32>
    %3 = arith.subf %0, %1 : vector<128x256xf32>
    %4 = arith.mulf %3, %3 : vector<128x256xf32>
    %cst_3 = arith.constant dense<0.000000e+00> : vector<128x1xf32>
    %5 = tpu.matmul %4, %2, %cst_3 {dimension_numbers = #tpu.dot_dimension_numbers<[1], [0], [0], [1], [0, 0, 1, 1], [], []>} : vector<128x256xf32>, vector<256x1xf32>, vector<128x1xf32> -> vector<128x1xf32>
    %6 = math.sqrt %5 : vector<128x1xf32>
    %7 = vector.shape_cast %6 : vector<128x1xf32> to vector<1x128x1xf32>
    %cst_4 = arith.constant dense<0.000000e+00> : vector<1xf32>
    %8 = vector.multi_reduction <add>, %7, %cst_4 [1, 2] : vector<1x128x1xf32> to vector<1xf32>
    %9 = vector.shape_cast %8 : vector<1xf32> to vector<1x1x1xf32>
    %10 = vector.extract %9[0, 0, 0] : f32 from vector<1x1x1xf32>
    %c0_5 = arith.constant 0 : index
    %c0_6 = arith.constant 0 : index
    %11 = vector.load %arg5[%c0_5, %c0_6] : memref<2x128xf32, #tpu.memory_space<vmem>>, vector<2x128xf32>
    %cst_7 = arith.constant dense<0.000000e+00> : vector<2x256xf32>
    %12 = tpu.matmul %11, %0, %cst_7 {dimension_numbers = #tpu.dot_dimension_numbers<[1], [0], [0], [1], [0, 0, 1, 1], [], []>} : vector<2x128xf32>, vector<128x256xf32>, vector<2x256xf32> -> vector<2x256xf32>
    %c0_8 = arith.constant 0 : index
    %c0_9 = arith.constant 0 : index
    %13 = vector.load %arg5[%c0_8, %c0_9] : memref<2x128xf32, #tpu.memory_space<vmem>>, vector<2x128xf32>
    %cst_10 = arith.constant dense<0.000000e+00> : vector<2x256xf32>
    %14 = tpu.matmul %13, %1, %cst_10 {dimension_numbers = #tpu.dot_dimension_numbers<[1], [0], [0], [1], [0, 0, 1, 1], [], []>} : vector<2x128xf32>, vector<128x256xf32>, vector<2x256xf32> -> vector<2x256xf32>
    %c0_11 = arith.constant 0 : index
    %c0_12 = arith.constant 0 : index
    %15 = vector.load %arg3[%c0_11, %c0_12] : memref<256x256xf32, #tpu.memory_space<vmem>>, vector<256x256xf32>
    %cst_13 = arith.constant dense<0.000000e+00> : vector<2x256xf32>
    %16 = tpu.matmul %14, %15, %cst_13 {dimension_numbers = #tpu.dot_dimension_numbers<[1], [1], [0], [0], [0, 0, 1, 0], [], []>} : vector<2x256xf32>, vector<256x256xf32>, vector<2x256xf32> -> vector<2x256xf32>
    %c0_14 = arith.constant 0 : index
    %c0_15 = arith.constant 0 : index
    %17 = vector.load %arg4[%c0_14, %c0_15] : memref<1x256xf32, #tpu.memory_space<vmem>>, vector<1x256xf32>
    %18 = vector.broadcast %17 : vector<1x256xf32> to vector<2x256xf32>
    %19 = arith.addf %16, %18 : vector<2x256xf32>
    %20 = arith.subf %12, %19 : vector<2x256xf32>
    %21 = arith.mulf %20, %20 : vector<2x256xf32>
    %22 = vector.shape_cast %21 : vector<2x256xf32> to vector<1x2x256xf32>
    %cst_16 = arith.constant dense<0.000000e+00> : vector<1xf32>
    %23 = vector.multi_reduction <add>, %22, %cst_16 [1, 2] : vector<1x2x256xf32> to vector<1xf32>
    %24 = vector.shape_cast %23 : vector<1xf32> to vector<1x1x1xf32>
    %25 = vector.extract %24[0, 0, 0] : f32 from vector<1x1x1xf32>
    %cst_17 = arith.constant dense<0.000000e+00> : vector<128x1xf32>
    %26 = tpu.matmul %0, %2, %cst_17 {dimension_numbers = #tpu.dot_dimension_numbers<[1], [0], [0], [1], [0, 0, 1, 1], [], []>} : vector<128x256xf32>, vector<256x1xf32>, vector<128x1xf32> -> vector<128x1xf32>
    %cst_18 = arith.constant 3.906250e-03 : f32
    %27 = vector.broadcast %cst_18 : f32 to vector<128x1xf32>
    %28 = arith.mulf %26, %27 : vector<128x1xf32>
    %cst_19 = arith.constant dense<0.000000e+00> : vector<128x1xf32>
    %29 = tpu.matmul %1, %2, %cst_19 {dimension_numbers = #tpu.dot_dimension_numbers<[1], [0], [0], [1], [0, 0, 1, 1], [], []>} : vector<128x256xf32>, vector<256x1xf32>, vector<128x1xf32> -> vector<128x1xf32>
    %cst_20 = arith.constant 3.906250e-03 : f32
    %30 = vector.broadcast %cst_20 : f32 to vector<128x1xf32>
    %31 = arith.mulf %29, %30 : vector<128x1xf32>
    %c0_21 = arith.constant 0 : index
    %c0_22 = arith.constant 0 : index
    %32 = vector.load %arg6[%c0_21, %c0_22] : memref<128x128xf32, #tpu.memory_space<vmem>>, vector<128x128xf32>
    %cst_23 = arith.constant dense<0.000000e+00> : vector<128x1xf32>
    %33 = tpu.matmul %32, %31, %cst_23 {dimension_numbers = #tpu.dot_dimension_numbers<[1], [0], [0], [1], [0, 0, 1, 1], [], []>} : vector<128x128xf32>, vector<128x1xf32>, vector<128x1xf32> -> vector<128x1xf32>
    %c0_24 = arith.constant 0 : index
    %34 = memref.load %arg7[%c0_24] : memref<1xf32, #tpu.memory_space<smem>>
    %35 = vector.broadcast %34 : f32 to vector<128x1xf32>
    %36 = arith.addf %33, %35 : vector<128x1xf32>
    %37 = arith.subf %28, %36 : vector<128x1xf32>
    %38 = arith.mulf %37, %37 : vector<128x1xf32>
    %39 = vector.shape_cast %38 : vector<128x1xf32> to vector<1x128x1xf32>
    %cst_25 = arith.constant dense<0.000000e+00> : vector<1xf32>
    %40 = vector.multi_reduction <add>, %39, %cst_25 [1, 2] : vector<1x128x1xf32> to vector<1xf32>
    %41 = vector.shape_cast %40 : vector<1xf32> to vector<1x1x1xf32>
    %42 = vector.extract %41[0, 0, 0] : f32 from vector<1x1x1xf32>
    %cst_26 = arith.constant 9.99999974E-5 : f32
    %43 = arith.mulf %cst_26, %10 : f32
    %44 = math.sqrt %25 : f32
    %cst_27 = arith.constant 2.000000e-01 : f32
    %45 = arith.mulf %cst_27, %44 : f32
    %46 = arith.addf %43, %45 : f32
    %47 = math.sqrt %42 : f32
    %cst_28 = arith.constant 2.000000e-02 : f32
    %48 = arith.mulf %cst_28, %47 : f32
    %49 = arith.addf %46, %48 : f32
    %50 = vector.broadcast %49 : f32 to vector<1x1xf32>
    %c0_29 = arith.constant 0 : index
    %c0_30 = arith.constant 0 : index
    %51 = vector.load %arg8[%c0_29, %c0_30] : memref<1x1xf32, #tpu.memory_space<vmem>>, vector<1x1xf32>
    tpu.vector_store %arg8[%c0_29, %c0_30], %50 {strides = array<i32>} : memref<1x1xf32, #tpu.memory_space<vmem>>, vector<1x1xf32>,
    return
  }
  func.func @transform_0(%arg0: i32) -> (i32, i32) {
    %c0_i32 = arith.constant 0 : i32
    %c0_i32_0 = arith.constant 0 : i32
    %c0_i32_1 = arith.constant 0 : i32
    return %c0_i32, %c0_i32_0 : i32, i32
  }
  func.func @transform_1(%arg0: i32) -> (i32, i32) {
    %c0_i32 = arith.constant 0 : i32
    %c0_i32_0 = arith.constant 0 : i32
    %c0_i32_1 = arith.constant 0 : i32
    return %c0_i32, %c0_i32_0 : i32, i32
  }
  func.func @transform_2(%arg0: i32) -> (i32, i32) {
    %c0_i32 = arith.constant 0 : i32
    %c0_i32_0 = arith.constant 0 : i32
    %c0_i32_1 = arith.constant 0 : i32
    return %c0_i32, %c0_i32_0 : i32, i32
  }
  func.func @transform_3(%arg0: i32) -> (i32, i32) {
    %c0_i32 = arith.constant 0 : i32
    %c0_i32_0 = arith.constant 0 : i32
    %c0_i32_1 = arith.constant 0 : i32
    return %c0_i32, %c0_i32_0 : i32, i32
  }
  func.func @transform_4(%arg0: i32) -> (i32, i32) {
    %c0_i32 = arith.constant 0 : i32
    %c0_i32_0 = arith.constant 0 : i32
    %c0_i32_1 = arith.constant 0 : i32
    return %c0_i32, %c0_i32_0 : i32, i32
  }
  func.func @transform_5(%arg0: i32) -> (i32, i32) {
    %c0_i32 = arith.constant 0 : i32
    %c0_i32_0 = arith.constant 0 : i32
    %c0_i32_1 = arith.constant 0 : i32
    return %c0_i32, %c0_i32_0 : i32, i32
  }
  func.func @transform_6(%arg0: i32) -> i32 {
    %c0_i32 = arith.constant 0 : i32
    %c0_i32_0 = arith.constant 0 : i32
    return %c0_i32 : i32
  }
  func.func @transform_7(%arg0: i32) -> (i32, i32) {
    %c0_i32 = arith.constant 0 : i32
    %c0_i32_0 = arith.constant 0 : i32
    %c0_i32_1 = arith.constant 0 : i32
    return %c0_i32, %c0_i32_0 : i32, i32
  }
}

</mosaic_0001>

<llo_original>
// kernel: pkt_loss.1
$region0: #{pkt_loss.1}
  #allocation0 [shape = 'u32[]', space=smem, size = 0x4, offset = 0x4, fixed_abs, tag = 'smem constant byte address 0x4 - core index']
  #allocation1 [shape = 'u32[144,128]{1,0:T(1,128)}', space=vmem, size = 0x12000, scoped, tag = 'internal scratch']
  #allocation2 [shape = 'f32[1]{0:T(128)S(6)}', space=smem, size = 0x200, scoped, tag = 'scoped memory for pkt_loss.1']
  %s0 = inlined_call_operand.vmem [shape: f32[128,256], index: 0, kind: input, shape index: {}]
  %s1 = inlined_call_operand.vmem [shape: f32[128,256], index: 1, kind: input, shape index: {}]
  %s2 = inlined_call_operand.vmem [shape: f32[256,256], index: 2, kind: input, shape index: {}]
  %s3 = inlined_call_operand.vmem [shape: f32[1,256], index: 3, kind: input, shape index: {}]
  %s4 = inlined_call_operand.vmem [shape: f32[2,128], index: 4, kind: input, shape index: {}]
  %s5 = inlined_call_operand.vmem [shape: f32[128,128], index: 5, kind: input, shape index: {}]
  %s6 = inlined_call_operand.<no memory space> [shape: f32[1], index: 6, kind: input, shape index: {}]
  %s7 = inlined_call_operand.hbm [shape: f32[1,1], index: 7, kind: output, shape index: {}]
  %s8 = sld [smem:[#allocation0]]
  $region38: #{pkt_loss.1} parent=0
    _
  %s10 = ssub.s32 1, %s8
  %s11 = scalar_select 0, %s10, %s8
  %12 = sst [smem:[#allocation2]] %s6
  $region1: #{pkt_loss.1} parent=0
    #allocation3 [shape = 'u8[512]{0}', space=vmem, size = 0x400, scoped, tag = 'output window, operand 0, single buffered']
    #allocation4 [shape = 's32[1]{0}', space=sflag, size = 0x4, scoped, tag = 'scoped memory for pkt_loss.1']
    %13 = vsyncpa [#allocation4], 0
    // Predicated region
    $region2: #{pkt_loss.1} parent=1 // pred_check
      _
    $region3: #{pkt_loss.1} parent=1 // pred_check_branch
      %15 = sbr.rel (0) target = $region5
    $region4: #{pkt_loss.1} parent=1 // pred_region
      _
    $region5: #{pkt_loss.1} parent=1 // pred_fallthru
      _
    // Predicated region
    $region6: #{pkt_loss.1} parent=1 // pred_check
      _
    $region7: #{pkt_loss.1} parent=1 // pred_check_branch
      %17 = sbr.rel (0) target = $region9
    $region8: #{pkt_loss.1} parent=1 // pred_region
      _
    $region9: #{pkt_loss.1} parent=1 // pred_fallthru
      _
    // Predicated region
    $region10: #{pkt_loss.1} parent=1 // pred_check
      _
    $region11: #{pkt_loss.1} parent=1 // pred_check_branch
      %19 = sbr.rel (0) target = $region13
    $region12: #{pkt_loss.1} parent=1 // pred_region
      _
    $region13: #{pkt_loss.1} parent=1 // pred_fallthru
      _
    // Predicated region
    $region14: #{pkt_loss.1} parent=1 // pred_check
      _
    $region15: #{pkt_loss.1} parent=1 // pred_check_branch
      %21 = sbr.rel (0) target = $region17
    $region16: #{pkt_loss.1} parent=1 // pred_region
      _
    $region17: #{pkt_loss.1} parent=1 // pred_fallthru
      _
    // Predicated region
    $region18: #{pkt_loss.1} parent=1 // pred_check
      _
    $region19: #{pkt_loss.1} parent=1 // pred_check_branch
      %23 = sbr.rel (0) target = $region21
    $region20: #{pkt_loss.1} parent=1 // pred_region
      _
    $region21: #{pkt_loss.1} parent=1 // pred_fallthru
      _
    // Predicated region
    $region22: #{pkt_loss.1} parent=1 // pred_check
      _
    $region23: #{pkt_loss.1} parent=1 // pred_check_branch
      %25 = sbr.rel (0) target = $region25
    $region24: #{pkt_loss.1} parent=1 // pred_region
      _
    $region25: #{pkt_loss.1} parent=1 // pred_fallthru
      _
    // Predicated region
    $region26: #{pkt_loss.1} parent=1 // pred_check
      _
    $region27: #{pkt_loss.1} parent=1 // pred_check_branch
      %27 = sbr.rel (0) target = $region29
    $region28: #{pkt_loss.1} parent=1 // pred_region
      _
    $region29: #{pkt_loss.1} parent=1 // pred_fallthru
      _
    %v28 = vld [vmem:[%s0] sm:$0xff]
    %v29 = vld [vmem:[%s0 + $0x8] sm:$0xff]
    %v30 = vld [vmem:[%s0 + $0x10] sm:$0xff]
    %v31 = vld [vmem:[%s0 + $0x18] sm:$0xff]
    %v32 = vld [vmem:[%s0 + $0x20] sm:$0xff]
    %v33 = vld [vmem:[%s0 + $0x28] sm:$0xff]
    %v34 = vld [vmem:[%s0 + $0x30] sm:$0xff]
    %v35 = vld [vmem:[%s0 + $0x38] sm:$0xff]
    %v36 = vld [vmem:[%s0 + $0x40] sm:$0xff]
    %v37 = vld [vmem:[%s0 + $0x48] sm:$0xff]
    %v38 = vld [vmem:[%s0 + $0x50] sm:$0xff]
    %v39 = vld [vmem:[%s0 + $0x58] sm:$0xff]
    %v40 = vld [vmem:[%s0 + $0x60] sm:$0xff]
    %v41 = vld [vmem:[%s0 + $0x68] sm:$0xff]
    %v42 = vld [vmem:[%s0 + $0x70] sm:$0xff]
    %v43 = vld [vmem:[%s0 + $0x78] sm:$0xff]
    %v44 = vld [vmem:[%s0 + $0x80] sm:$0xff]
    %v45 = vld [vmem:[%s0 + $0x88] sm:$0xff]
    %v46 = vld [vmem:[%s0 + $0x90] sm:$0xff]
    %v47 = vld [vmem:[%s0 + $0x98] sm:$0xff]
    %v48 = vld [vmem:[%s0 + $0xa0] sm:$0xff]
    %v49 = vld [vmem:[%s0 + $0xa8] sm:$0xff]
    %v50 = vld [vmem:[%s0 + $0xb0] sm:$0xff]
    %v51 = vld [vmem:[%s0 + $0xb8] sm:$0xff]
    %v52 = vld [vmem:[%s0 + $0xc0] sm:$0xff]
    %v53 = vld [vmem:[%s0 + $0xc8] sm:$0xff]
    %v54 = vld [vmem:[%s0 + $0xd0] sm:$0xff]
    %v55 = vld [vmem:[%s0 + $0xd8] sm:$0xff]
    %v56 = vld [vmem:[%s0 + $0xe0] sm:$0xff]
    %v57 = vld [vmem:[%s0 + $0xe8] sm:$0xff]
    %v58 = vld [vmem:[%s0 + $0xf0] sm:$0xff]
    %v59 = vld [vmem:[%s0 + $0xf8] sm:$0xff]
    %v60 = vld [vmem:[%s1] sm:$0xff]
    %v61 = vld [vmem:[%s1 + $0x8] sm:$0xff]
    %v62 = vld [vmem:[%s1 + $0x10] sm:$0xff]
    %v63 = vld [vmem:[%s1 + $0x18] sm:$0xff]
    %v64 = vld [vmem:[%s1 + $0x20] sm:$0xff]
    %v65 = vld [vmem:[%s1 + $0x28] sm:$0xff]
    %v66 = vld [vmem:[%s1 + $0x30] sm:$0xff]
    %v67 = vld [vmem:[%s1 + $0x38] sm:$0xff]
    %v68 = vld [vmem:[%s1 + $0x40] sm:$0xff]
    %v69 = vld [vmem:[%s1 + $0x48] sm:$0xff]
    %v70 = vld [vmem:[%s1 + $0x50] sm:$0xff]
    %v71 = vld [vmem:[%s1 + $0x58] sm:$0xff]
    %v72 = vld [vmem:[%s1 + $0x60] sm:$0xff]
    %v73 = vld [vmem:[%s1 + $0x68] sm:$0xff]
    %v74 = vld [vmem:[%s1 + $0x70] sm:$0xff]
    %v75 = vld [vmem:[%s1 + $0x78] sm:$0xff]
    %v76 = vld [vmem:[%s1 + $0x80] sm:$0xff]
    %v77 = vld [vmem:[%s1 + $0x88] sm:$0xff]
    %v78 = vld [vmem:[%s1 + $0x90] sm:$0xff]
    %v79 = vld [vmem:[%s1 + $0x98] sm:$0xff]
    %v80 = vld [vmem:[%s1 + $0xa0] sm:$0xff]
    %v81 = vld [vmem:[%s1 + $0xa8] sm:$0xff]
    %v82 = vld [vmem:[%s1 + $0xb0] sm:$0xff]
    %v83 = vld [vmem:[%s1 + $0xb8] sm:$0xff]
    %v84 = vld [vmem:[%s1 + $0xc0] sm:$0xff]
    %v85 = vld [vmem:[%s1 + $0xc8] sm:$0xff]
    %v86 = vld [vmem:[%s1 + $0xd0] sm:$0xff]
    %v87 = vld [vmem:[%s1 + $0xd8] sm:$0xff]
    %v88 = vld [vmem:[%s1 + $0xe0] sm:$0xff]
    %v89 = vld [vmem:[%s1 + $0xe8] sm:$0xff]
    %v90 = vld [vmem:[%s1 + $0xf0] sm:$0xff]
    %v91 = vld [vmem:[%s1 + $0xf8] sm:$0xff]
    %v92 = vsub.f32 %v28, %v60
    %v93 = vsub.f32 %v29, %v61
    %v94 = vsub.f32 %v30, %v62
    %v95 = vsub.f32 %v31, %v63
    %v96 = vsub.f32 %v32, %v64
    %v97 = vsub.f32 %v33, %v65
    %v98 = vsub.f32 %v34, %v66
    %v99 = vsub.f32 %v35, %v67
    %v100 = vsub.f32 %v36, %v68
    %v101 = vsub.f32 %v37, %v69
    %v102 = vsub.f32 %v38, %v70
    %v103 = vsub.f32 %v39, %v71
    %v104 = vsub.f32 %v40, %v72
    %v105 = vsub.f32 %v41, %v73
    %v106 = vsub.f32 %v42, %v74
    %v107 = vsub.f32 %v43, %v75
    %v108 = vsub.f32 %v44, %v76
    %v109 = vsub.f32 %v45, %v77
    %v110 = vsub.f32 %v46, %v78
    %v111 = vsub.f32 %v47, %v79
    %v112 = vsub.f32 %v48, %v80
    %v113 = vsub.f32 %v49, %v81
    %v114 = vsub.f32 %v50, %v82
    %v115 = vsub.f32 %v51, %v83
    %v116 = vsub.f32 %v52, %v84
    %v117 = vsub.f32 %v53, %v85
    %v118 = vsub.f32 %v54, %v86
    %v119 = vsub.f32 %v55, %v87
    %v120 = vsub.f32 %v56, %v88
    %v121 = vsub.f32 %v57, %v89
    %v122 = vsub.f32 %v58, %v90
    %v123 = vsub.f32 %v59, %v91
    %v124 = vmul.f32 %v92, %v92
    %v125 = vmul.f32 %v93, %v93
    %v126 = vmul.f32 %v94, %v94
    %v127 = vmul.f32 %v95, %v95
    %v128 = vmul.f32 %v96, %v96
    %v129 = vmul.f32 %v97, %v97
    %v130 = vmul.f32 %v98, %v98
    %v131 = vmul.f32 %v99, %v99
    %v132 = vmul.f32 %v100, %v100
    %v133 = vmul.f32 %v101, %v101
    %v134 = vmul.f32 %v102, %v102
    %v135 = vmul.f32 %v103, %v103
    %v136 = vmul.f32 %v104, %v104
    %v137 = vmul.f32 %v105, %v105
    %v138 = vmul.f32 %v106, %v106
    %v139 = vmul.f32 %v107, %v107
    %v140 = vmul.f32 %v108, %v108
    %v141 = vmul.f32 %v109, %v109
    %v142 = vmul.f32 %v110, %v110
    %v143 = vmul.f32 %v111, %v111
    %v144 = vmul.f32 %v112, %v112
    %v145 = vmul.f32 %v113, %v113
    %v146 = vmul.f32 %v114, %v114
    %v147 = vmul.f32 %v115, %v115
    %v148 = vmul.f32 %v116, %v116
    %v149 = vmul.f32 %v117, %v117
    %v150 = vmul.f32 %v118, %v118
    %v151 = vmul.f32 %v119, %v119
    %v152 = vmul.f32 %v120, %v120
    %v153 = vmul.f32 %v121, %v121
    %v154 = vmul.f32 %v122, %v122
    %v155 = vmul.f32 %v123, %v123
    %156 = vmatprep.subr.mxu0 0.0
    %157 = vmatpush1.msra.mxu0 1.0
    %158 = vmatprep.subr.mxu0 0.0
    %159 = vmatpush1.msra.mxu0 1.0
    %160 = vmatprep.subr.mxu0 0.0
    %161 = vmatpush1.msra.mxu0 1.0
    %162 = vmatprep.subr.mxu0 0.0
    %163 = vmatpush1.msra.mxu0 1.0
    %164 = vmatprep.subr.mxu0 0.0
    %165 = vmatpush1.msra.mxu0 1.0
    %166 = vmatprep.subr.mxu0 0.0
    %167 = vmatpush1.msra.mxu0 1.0
    %168 = vmatprep.subr.mxu0 0.0
    %169 = vmatpush1.msra.mxu0 1.0
    %170 = vmatprep.subr.mxu0 0.0
    %171 = vmatpush1.msra.mxu0 1.0
    %172 = vmatprep.subr.mxu0 0.0
    %173 = vmatpush1.msra.mxu0 1.0
    %174 = vmatprep.subr.mxu0 0.0
    %175 = vmatpush1.msra.mxu0 1.0
    %176 = vmatprep.subr.mxu0 0.0
    %177 = vmatpush1.msra.mxu0 1.0
    %178 = vmatprep.subr.mxu0 0.0
    %179 = vmatpush1.msra.mxu0 1.0
    %180 = vmatprep.subr.mxu0 0.0
    %181 = vmatpush1.msra.mxu0 1.0
    %182 = vmatprep.subr.mxu0 0.0
    %183 = vmatpush1.msra.mxu0 1.0
    %184 = vmatprep.subr.mxu0 0.0
    %185 = vmatpush1.msra.mxu0 1.0
    %186 = vmatprep.subr.mxu0 0.0
    %187 = vmatpush1.msra.mxu0 1.0
    %188 = vmatprep.subr.mxu0 0.0
    %189 = vmatpush1.msra.mxu0 1.0
    %190 = vmatprep.subr.mxu0 0.0
    %191 = vmatpush1.msra.mxu0 1.0
    %192 = vmatprep.subr.mxu0 0.0
    %193 = vmatpush1.msra.mxu0 1.0
    %194 = vmatprep.subr.mxu0 0.0
    %195 = vmatpush1.msra.mxu0 1.0
    %196 = vmatprep.subr.mxu0 0.0
    %197 = vmatpush1.msra.mxu0 1.0
    %198 = vmatprep.subr.mxu0 0.0
    %199 = vmatpush1.msra.mxu0 1.0
    %200 = vmatprep.subr.mxu0 0.0
    %201 = vmatpush1.msra.mxu0 1.0
    %202 = vmatprep.subr.mxu0 0.0
    %203 = vmatpush1.msra.mxu0 1.0
    %204 = vmatprep.subr.mxu0 0.0
    %205 = vmatpush1.msra.mxu0 1.0
    %206 = vmatprep.subr.mxu0 0.0
    %207 = vmatpush1.msra.mxu0 1.0
    %208 = vmatprep.subr.mxu0 0.0
    %209 = vmatpush1.msra.mxu0 1.0
    %210 = vmatprep.subr.mxu0 0.0
    %211 = vmatpush1.msra.mxu0 1.0
    %212 = vmatprep.subr.mxu0 0.0
    %213 = vmatpush1.msra.mxu0 1.0
    %214 = vmatprep.subr.mxu0 0.0
    %215 = vmatpush1.msra.mxu0 1.0
    %216 = vmatprep.subr.mxu0 0.0
    %217 = vmatpush1.msra.mxu0 1.0
    %218 = vmatprep.subr.mxu0 0.0
    %219 = vmatpush1.msra.mxu0 1.0
    %220 = vmatprep.mubr.f32.mxu0 %v125
    %221 = vmatmul.mubr.f32.gmra.mrb[0].mxu0 %v124
    %v222 = vpop.f32.mrb[0].mxu0
    %v223 = vadd.f32 0.0, %v222
    %v224 = vpop.f32.mrb[0].mxu0
    %225 = vmatprep.mubr.f32.mxu0 %v127
    %226 = vmatmul.mubr.f32.gmra.mrb[0].mxu0 %v126
    %v227 = vpop.f32.mrb[0].mxu0
    %v228 = vadd.f32 0.0, %v227
    %v229 = vpop.f32.mrb[0].mxu0
    %230 = vmatprep.mubr.f32.mxu0 %v129
    %231 = vmatmul.mubr.f32.gmra.mrb[0].mxu0 %v128
    %v232 = vpop.f32.mrb[0].mxu0
    %v233 = vadd.f32 0.0, %v232
    %v234 = vpop.f32.mrb[0].mxu0
    %235 = vmatprep.mubr.f32.mxu0 %v131
    %236 = vmatmul.mubr.f32.gmra.mrb[0].mxu0 %v130
    %v237 = vpop.f32.mrb[0].mxu0
    %v238 = vadd.f32 0.0, %v237
    %v239 = vpop.f32.mrb[0].mxu0
    %240 = vmatprep.mubr.f32.mxu0 %v133
    %241 = vmatmul.mubr.f32.gmra.mrb[0].mxu0 %v132
    %v242 = vpop.f32.mrb[0].mxu0
    %v243 = vadd.f32 0.0, %v242
    %v244 = vpop.f32.mrb[0].mxu0
    %245 = vmatprep.mubr.f32.mxu0 %v135
    %246 = vmatmul.mubr.f32.gmra.mrb[0].mxu0 %v134
    %v247 = vpop.f32.mrb[0].mxu0
    %v248 = vadd.f32 0.0, %v247
    %v249 = vpop.f32.mrb[0].mxu0
    %250 = vmatprep.mubr.f32.mxu0 %v137
    %251 = vmatmul.mubr.f32.gmra.mrb[0].mxu0 %v136
    %v252 = vpop.f32.mrb[0].mxu0
    %v253 = vadd.f32 0.0, %v252
    %v254 = vpop.f32.mrb[0].mxu0
    %255 = vmatprep.mubr.f32.mxu0 %v139
    %256 = vmatmul.mubr.f32.gmra.mrb[0].mxu0 %v138
    %v257 = vpop.f32.mrb[0].mxu0
    %v258 = vadd.f32 0.0, %v257
    %v259 = vpop.f32.mrb[0].mxu0
    %260 = vmatprep.mubr.f32.mxu0 %v141
    %261 = vmatmul.mubr.f32.gmra.mrb[0].mxu0 %v140
    %v262 = vpop.f32.mrb[0].mxu0
    %v263 = vadd.f32 0.0, %v262
    %v264 = vpop.f32.mrb[0].mxu0
    %265 = vmatprep.mubr.f32.mxu0 %v143
    %266 = vmatmul.mubr.f32.gmra.mrb[0].mxu0 %v142
    %v267 = vpop.f32.mrb[0].mxu0
    %v268 = vadd.f32 0.0, %v267
    %v269 = vpop.f32.mrb[0].mxu0
    %270 = vmatprep.mubr.f32.mxu0 %v145
    %271 = vmatmul.mubr.f32.gmra.mrb[0].mxu0 %v144
    %v272 = vpop.f32.mrb[0].mxu0
    %v273 = vadd.f32 0.0, %v272
    %v274 = vpop.f32.mrb[0].mxu0
    %275 = vmatprep.mubr.f32.mxu0 %v147
    %276 = vmatmul.mubr.f32.gmra.mrb[0].mxu0 %v146
    %v277 = vpop.f32.mrb[0].mxu0
    %v278 = vadd.f32 0.0, %v277
    %v279 = vpop.f32.mrb[0].mxu0
    %280 = vmatprep.mubr.f32.mxu0 %v149
    %281 = vmatmul.mubr.f32.gmra.mrb[0].mxu0 %v148
    %v282 = vpop.f32.mrb[0].mxu0
    %v283 = vadd.f32 0.0, %v282
    %v284 = vpop.f32.mrb[0].mxu0
    %285 = vmatprep.mubr.f32.mxu0 %v151
    %286 = vmatmul.mubr.f32.gmra.mrb[0].mxu0 %v150
    %v287 = vpop.f32.mrb[0].mxu0
    %v288 = vadd.f32 0.0, %v287
    %v289 = vpop.f32.mrb[0].mxu0
    %290 = vmatprep.mubr.f32.mxu0 %v153
    %291 = vmatmul.mubr.f32.gmra.mrb[0].mxu0 %v152
    %v292 = vpop.f32.mrb[0].mxu0
    %v293 = vadd.f32 0.0, %v292
    %v294 = vpop.f32.mrb[0].mxu0
    %295 = vmatprep.mubr.f32.mxu0 %v155
    %296 = vmatmul.mubr.f32.gmra.mrb[0].mxu0 %v154
    %v297 = vpop.f32.mrb[0].mxu0
    %v298 = vadd.f32 0.0, %v297
    %v299 = vpop.f32.mrb[0].mxu0
    %300 = vdwg.mxu0
    %v301 = vrsqrt.pop %v223
    %v302 = vmul.f32 %v223, %v301
    %vm303 = vcmp.eq.f32.partialorder %v223, inf
    %v304 = vsel %vm303, %v223, %v302
    %vm305 = vcmp.eq.f32.partialorder %v223, 0.0
    %v306 = vand.u32 %v223, 2147483648
    %v307 = vsel %vm305, %v306, %v304
    %v308 = vrsqrt.pop %v228
    %v309 = vmul.f32 %v228, %v308
    %vm310 = vcmp.eq.f32.partialorder %v228, inf
    %v311 = vsel %vm310, %v228, %v309
    %vm312 = vcmp.eq.f32.partialorder %v228, 0.0
    %v313 = vand.u32 %v228, 2147483648
    %v314 = vsel %vm312, %v313, %v311
    %v315 = vrsqrt.pop %v233
    %v316 = vmul.f32 %v233, %v315
    %vm317 = vcmp.eq.f32.partialorder %v233, inf
    %v318 = vsel %vm317, %v233, %v316
    %vm319 = vcmp.eq.f32.partialorder %v233, 0.0
    %v320 = vand.u32 %v233, 2147483648
    %v321 = vsel %vm319, %v320, %v318
    %v322 = vrsqrt.pop %v238
    %v323 = vmul.f32 %v238, %v322
    %vm324 = vcmp.eq.f32.partialorder %v238, inf
    %v325 = vsel %vm324, %v238, %v323
    %vm326 = vcmp.eq.f32.partialorder %v238, 0.0
    %v327 = vand.u32 %v238, 2147483648
    %v328 = vsel %vm326, %v327, %v325
    %v329 = vrsqrt.pop %v243
    %v330 = vmul.f32 %v243, %v329
    %vm331 = vcmp.eq.f32.partialorder %v243, inf
    %v332 = vsel %vm331, %v243, %v330
    %vm333 = vcmp.eq.f32.partialorder %v243, 0.0
    %v334 = vand.u32 %v243, 2147483648
    %v335 = vsel %vm333, %v334, %v332
    %v336 = vrsqrt.pop %v248
    %v337 = vmul.f32 %v248, %v336
    %vm338 = vcmp.eq.f32.partialorder %v248, inf
    %v339 = vsel %vm338, %v248, %v337
    %vm340 = vcmp.eq.f32.partialorder %v248, 0.0
    %v341 = vand.u32 %v248, 2147483648
    %v342 = vsel %vm340, %v341, %v339
    %v343 = vrsqrt.pop %v253
    %v344 = vmul.f32 %v253, %v343
    %vm345 = vcmp.eq.f32.partialorder %v253, inf
    %v346 = vsel %vm345, %v253, %v344
    %vm347 = vcmp.eq.f32.partialorder %v253, 0.0
    %v348 = vand.u32 %v253, 2147483648
    %v349 = vsel %vm347, %v348, %v346
    %v350 = vrsqrt.pop %v258
    %v351 = vmul.f32 %v258, %v350
    %vm352 = vcmp.eq.f32.partialorder %v258, inf
    %v353 = vsel %vm352, %v258, %v351
    %vm354 = vcmp.eq.f32.partialorder %v258, 0.0
    %v355 = vand.u32 %v258, 2147483648
    %v356 = vsel %vm354, %v355, %v353
    %v357 = vrsqrt.pop %v263
    %v358 = vmul.f32 %v263, %v357
    %vm359 = vcmp.eq.f32.partialorder %v263, inf
    %v360 = vsel %vm359, %v263, %v358
    %vm361 = vcmp.eq.f32.partialorder %v263, 0.0
    %v362 = vand.u32 %v263, 2147483648
    %v363 = vsel %vm361, %v362, %v360
    %v364 = vrsqrt.pop %v268
    %v365 = vmul.f32 %v268, %v364
    %vm366 = vcmp.eq.f32.partialorder %v268, inf
    %v367 = vsel %vm366, %v268, %v365
    %vm368 = vcmp.eq.f32.partialorder %v268, 0.0
    %v369 = vand.u32 %v268, 2147483648
    %v370 = vsel %vm368, %v369, %v367
    %v371 = vrsqrt.pop %v273
    %v372 = vmul.f32 %v273, %v371
    %vm373 = vcmp.eq.f32.partialorder %v273, inf
    %v374 = vsel %vm373, %v273, %v372
    %vm375 = vcmp.eq.f32.partialorder %v273, 0.0
    %v376 = vand.u32 %v273, 2147483648
    %v377 = vsel %vm375, %v376, %v374
    %v378 = vrsqrt.pop %v278
    %v379 = vmul.f32 %v278, %v378
    %vm380 = vcmp.eq.f32.partialorder %v278, inf
    %v381 = vsel %vm380, %v278, %v379
    %vm382 = vcmp.eq.f32.partialorder %v278, 0.0
    %v383 = vand.u32 %v278, 2147483648
    %v384 = vsel %vm382, %v383, %v381
    %v385 = vrsqrt.pop %v283
    %v386 = vmul.f32 %v283, %v385
    %vm387 = vcmp.eq.f32.partialorder %v283, inf
    %v388 = vsel %vm387, %v283, %v386
    %vm389 = vcmp.eq.f32.partialorder %v283, 0.0
    %v390 = vand.u32 %v283, 2147483648
    %v391 = vsel %vm389, %v390, %v388
    %v392 = vrsqrt.pop %v288
    %v393 = vmul.f32 %v288, %v392
    %vm394 = vcmp.eq.f32.partialorder %v288, inf
    %v395 = vsel %vm394, %v288, %v393
    %vm396 = vcmp.eq.f32.partialorder %v288, 0.0
    %v397 = vand.u32 %v288, 2147483648
    %v398 = vsel %vm396, %v397, %v395
    %v399 = vrsqrt.pop %v293
    %v400 = vmul.f32 %v293, %v399
    %vm401 = vcmp.eq.f32.partialorder %v293, inf
    %v402 = vsel %vm401, %v293, %v400
    %vm403 = vcmp.eq.f32.partialorder %v293, 0.0
    %v404 = vand.u32 %v293, 2147483648
    %v405 = vsel %vm403, %v404, %v402
    %v406 = vrsqrt.pop %v298
    %v407 = vmul.f32 %v298, %v406
    %vm408 = vcmp.eq.f32.partialorder %v298, inf
    %v409 = vsel %vm408, %v298, %v407
    %vm410 = vcmp.eq.f32.partialorder %v298, 0.0
    %v411 = vand.u32 %v298, 2147483648
    %v412 = vsel %vm410, %v411, %v409
    %vm413 = vcmask 7168
    %v414 = vsel %vm413, %v307, 0.0
    %v415 = vsel %vm413, %v314, 0.0
    %v416 = vadd.f32 %v414, %v415
    %v417 = vsel %vm413, %v321, 0.0
    %v418 = vadd.f32 %v416, %v417
    %v419 = vsel %vm413, %v328, 0.0
    %v420 = vadd.f32 %v418, %v419
    %v421 = vsel %vm413, %v335, 0.0
    %v422 = vadd.f32 %v420, %v421
    %v423 = vsel %vm413, %v342, 0.0
    %v424 = vadd.f32 %v422, %v423
    %v425 = vsel %vm413, %v349, 0.0
    %v426 = vadd.f32 %v424, %v425
    %v427 = vsel %vm413, %v356, 0.0
    %v428 = vadd.f32 %v426, %v427
    %v429 = vsel %vm413, %v363, 0.0
    %v430 = vadd.f32 %v428, %v429
    %v431 = vsel %vm413, %v370, 0.0
    %v432 = vadd.f32 %v430, %v431
    %v433 = vsel %vm413, %v377, 0.0
    %v434 = vadd.f32 %v432, %v433
    %v435 = vsel %vm413, %v384, 0.0
    %v436 = vadd.f32 %v434, %v435
    %v437 = vsel %vm413, %v391, 0.0
    %v438 = vadd.f32 %v436, %v437
    %v439 = vsel %vm413, %v398, 0.0
    %v440 = vadd.f32 %v438, %v439
    %v441 = vsel %vm413, %v405, 0.0
    %v442 = vadd.f32 %v440, %v441
    %v443 = vsel %vm413, %v412, 0.0
    %v444 = vadd.f32 %v442, %v443
    %445 = vadd.xlane.f32.xlu0 %v444
    %v446 = vpop.xlane.xlu0 %445
    %v447 = vrot.slane %v446, 4
    %v448 = vadd.f32 %v446, %v447
    %v449 = vrot.slane %v448, 2
    %v450 = vadd.f32 %v448, %v449
    %v451 = vrot.slane %v450, 1
    %v452 = vadd.f32 %v450, %v451
    %s453 = vtos %v452
    %v454 = vld [vmem:[%s4] sm:$0x3]
    %455 = vmatprep.subr.mxu0 %v29
    %456 = vmatpush1.msra.mxu0 %v28
    %457 = vmatprep.subr.mxu0 %v31
    %458 = vmatpush1.msra.mxu0 %v30
    %459 = vmatprep.subr.mxu0 %v33
    %460 = vmatpush1.msra.mxu0 %v32
    %461 = vmatprep.subr.mxu0 %v35
    %462 = vmatpush1.msra.mxu0 %v34
    %463 = vmatprep.subr.mxu0 %v37
    %464 = vmatpush1.msra.mxu0 %v36
    %465 = vmatprep.subr.mxu0 %v39
    %466 = vmatpush1.msra.mxu0 %v38
    %467 = vmatprep.subr.mxu0 %v41
    %468 = vmatpush1.msra.mxu0 %v40
    %469 = vmatprep.subr.mxu0 %v43
    %470 = vmatpush1.msra.mxu0 %v42
    %471 = vmatprep.subr.mxu0 %v45
    %472 = vmatpush1.msra.mxu0 %v44
    %473 = vmatprep.subr.mxu0 %v47
    %474 = vmatpush1.msra.mxu0 %v46
    %475 = vmatprep.subr.mxu0 %v49
    %476 = vmatpush1.msra.mxu0 %v48
    %477 = vmatprep.subr.mxu0 %v51
    %478 = vmatpush1.msra.mxu0 %v50
    %479 = vmatprep.subr.mxu0 %v53
    %480 = vmatpush1.msra.mxu0 %v52
    %481 = vmatprep.subr.mxu0 %v55
    %482 = vmatpush1.msra.mxu0 %v54
    %483 = vmatprep.subr.mxu0 %v57
    %484 = vmatpush1.msra.mxu0 %v56
    %485 = vmatprep.subr.mxu0 %v59
    %486 = vmatpush1.msra.mxu0 %v58
    %487 = vmatprep.subr.mxu0 0.0
    %488 = vmatpush1.msra.mxu0 0.0
    %489 = vmatprep.subr.mxu0 0.0
    %490 = vmatpush1.msra.mxu0 0.0
    %491 = vmatprep.subr.mxu0 0.0
    %492 = vmatpush1.msra.mxu0 0.0
    %493 = vmatprep.subr.mxu0 0.0
    %494 = vmatpush1.msra.mxu0 0.0
    %495 = vmatprep.subr.mxu0 0.0
    %496 = vmatpush1.msra.mxu0 0.0
    %497 = vmatprep.subr.mxu0 0.0
    %498 = vmatpush1.msra.mxu0 0.0
    %499 = vmatprep.subr.mxu0 0.0
    %500 = vmatpush1.msra.mxu0 0.0
    %501 = vmatprep.subr.mxu0 0.0
    %502 = vmatpush1.msra.mxu0 0.0
    %503 = vmatprep.subr.mxu0 0.0
    %504 = vmatpush1.msra.mxu0 0.0
    %505 = vmatprep.subr.mxu0 0.0
    %506 = vmatpush1.msra.mxu0 0.0
    %507 = vmatprep.subr.mxu0 0.0
    %508 = vmatpush1.msra.mxu0 0.0
    %509 = vmatprep.subr.mxu0 0.0
    %510 = vmatpush1.msra.mxu0 0.0
    %511 = vmatprep.subr.mxu0 0.0
    %512 = vmatpush1.msra.mxu0 0.0
    %513 = vmatprep.subr.mxu0 0.0
    %514 = vmatpush1.msra.mxu0 0.0
    %515 = vmatprep.subr.mxu0 0.0
    %516 = vmatpush1.msra.mxu0 0.0
    %517 = vmatprep.subr.mxu0 0.0
    %518 = vmatpush1.msra.mxu0 0.0
    %519 = vmatprep.mubr.f32.mxu0 0.0
    %520 = vmatmul.mubr.f32.gmra.mrb[0].mxu0 %v454
    %v521 = vpop.f32.mrb[0].mxu0
    %v522 = vadd.f32 0.0, %v521
    %v523 = vpop.f32.mrb[0].mxu0
    %v524 = vadd.f32 0.0, %v523
    %525 = vdwg.mxu0
    %526 = vmatprep.subr.mxu0 %v61
    %527 = vmatpush1.msra.mxu0 %v60
    %528 = vmatprep.subr.mxu0 %v63
    %529 = vmatpush1.msra.mxu0 %v62
    %530 = vmatprep.subr.mxu0 %v65
    %531 = vmatpush1.msra.mxu0 %v64
    %532 = vmatprep.subr.mxu0 %v67
    %533 = vmatpush1.msra.mxu0 %v66
    %534 = vmatprep.subr.mxu0 %v69
    %535 = vmatpush1.msra.mxu0 %v68
    %536 = vmatprep.subr.mxu0 %v71
    %537 = vmatpush1.msra.mxu0 %v70
    %538 = vmatprep.subr.mxu0 %v73
    %539 = vmatpush1.msra.mxu0 %v72
    %540 = vmatprep.subr.mxu0 %v75
    %541 = vmatpush1.msra.mxu0 %v74
    %542 = vmatprep.subr.mxu0 %v77
    %543 = vmatpush1.msra.mxu0 %v76
    %544 = vmatprep.subr.mxu0 %v79
    %545 = vmatpush1.msra.mxu0 %v78
    %546 = vmatprep.subr.mxu0 %v81
    %547 = vmatpush1.msra.mxu0 %v80
    %548 = vmatprep.subr.mxu0 %v83
    %549 = vmatpush1.msra.mxu0 %v82
    %550 = vmatprep.subr.mxu0 %v85
    %551 = vmatpush1.msra.mxu0 %v84
    %552 = vmatprep.subr.mxu0 %v87
    %553 = vmatpush1.msra.mxu0 %v86
    %554 = vmatprep.subr.mxu0 %v89
    %555 = vmatpush1.msra.mxu0 %v88
    %556 = vmatprep.subr.mxu0 %v91
    %557 = vmatpush1.msra.mxu0 %v90
    %558 = vmatprep.subr.mxu0 0.0
    %559 = vmatpush1.msra.mxu0 0.0
    %560 = vmatprep.subr.mxu0 0.0
    %561 = vmatpush1.msra.mxu0 0.0
    %562 = vmatprep.subr.mxu0 0.0
    %563 = vmatpush1.msra.mxu0 0.0
    %564 = vmatprep.subr.mxu0 0.0
    %565 = vmatpush1.msra.mxu0 0.0
    %566 = vmatprep.subr.mxu0 0.0
    %567 = vmatpush1.msra.mxu0 0.0
    %568 = vmatprep.subr.mxu0 0.0
    %569 = vmatpush1.msra.mxu0 0.0
    %570 = vmatprep.subr.mxu0 0.0
    %571 = vmatpush1.msra.mxu0 0.0
    %572 = vmatprep.subr.mxu0 0.0
    %573 = vmatpush1.msra.mxu0 0.0
    %574 = vmatprep.subr.mxu0 0.0
    %575 = vmatpush1.msra.mxu0 0.0
    %576 = vmatprep.subr.mxu0 0.0
    %577 = vmatpush1.msra.mxu0 0.0
    %578 = vmatprep.subr.mxu0 0.0
    %579 = vmatpush1.msra.mxu0 0.0
    %580 = vmatprep.subr.mxu0 0.0
    %581 = vmatpush1.msra.mxu0 0.0
    %582 = vmatprep.subr.mxu0 0.0
    %583 = vmatpush1.msra.mxu0 0.0
    %584 = vmatprep.subr.mxu0 0.0
    %585 = vmatpush1.msra.mxu0 0.0
    %586 = vmatprep.subr.mxu0 0.0
    %587 = vmatpush1.msra.mxu0 0.0
    %588 = vmatprep.subr.mxu0 0.0
    %589 = vmatpush1.msra.mxu0 0.0
    %590 = vmatprep.mubr.f32.mxu0 0.0
    %591 = vmatmul.mubr.f32.gmra.mrb[0].mxu0 %v454
    %v592 = vpop.f32.mrb[0].mxu0
    %v593 = vadd.f32 0.0, %v592
    %v594 = vpop.f32.mrb[0].mxu0
    %v595 = vadd.f32 0.0, %v594
    %596 = vdwg.mxu0
    %v597 = vld [vmem:[%s2] sm:$0xff]
    %v598 = vld [vmem:[%s2 + $0x8] sm:$0xff]
    %v599 = vld [vmem:[%s2 + $0x10] sm:$0xff]
    %v600 = vld [vmem:[%s2 + $0x18] sm:$0xff]
    %v601 = vld [vmem:[%s2 + $0x20] sm:$0xff]
    %v602 = vld [vmem:[%s2 + $0x28] sm:$0xff]
    %v603 = vld [vmem:[%s2 + $0x30] sm:$0xff]
    %v604 = vld [vmem:[%s2 + $0x38] sm:$0xff]
    %v605 = vld [vmem:[%s2 + $0x40] sm:$0xff]
    %v606 = vld [vmem:[%s2 + $0x48] sm:$0xff]
    %v607 = vld [vmem:[%s2 + $0x50] sm:$0xff]
    %v608 = vld [vmem:[%s2 + $0x58] sm:$0xff]
    %v609 = vld [vmem:[%s2 + $0x60] sm:$0xff]
    %v610 = vld [vmem:[%s2 + $0x68] sm:$0xff]
    %v611 = vld [vmem:[%s2 + $0x70] sm:$0xff]
    %v612 = vld [vmem:[%s2 + $0x78] sm:$0xff]
    %v613 = vld [vmem:[%s2 + $0x80] sm:$0xff]
    %v614 = vld [vmem:[%s2 + $0x88] sm:$0xff]
    %v615 = vld [vmem:[%s2 + $0x90] sm:$0xff]
    %v616 = vld [vmem:[%s2 + $0x98] sm:$0xff]
    %v617 = vld [vmem:[%s2 + $0xa0] sm:$0xff]
    %v618 = vld [vmem:[%s2 + $0xa8] sm:$0xff]
    %v619 = vld [vmem:[%s2 + $0xb0] sm:$0xff]
    %v620 = vld [vmem:[%s2 + $0xb8] sm:$0xff]
    %v621 = vld [vmem:[%s2 + $0xc0] sm:$0xff]
    %v622 = vld [vmem:[%s2 + $0xc8] sm:$0xff]
    %v623 = vld [vmem:[%s2 + $0xd0] sm:$0xff]
    %v624 = vld [vmem:[%s2 + $0xd8] sm:$0xff]
    %v625 = vld [vmem:[%s2 + $0xe0] sm:$0xff]
    %v626 = vld [vmem:[%s2 + $0xe8] sm:$0xff]
    %v627 = vld [vmem:[%s2 + $0xf0] sm:$0xff]
    %v628 = vld [vmem:[%s2 + $0xf8] sm:$0xff]
    %v629 = vld [vmem:[%s2 + $0x100] sm:$0xff]
    %v630 = vld [vmem:[%s2 + $0x108] sm:$0xff]
    %v631 = vld [vmem:[%s2 + $0x110] sm:$0xff]
    %v632 = vld [vmem:[%s2 + $0x118] sm:$0xff]
    %v633 = vld [vmem:[%s2 + $0x120] sm:$0xff]
    %v634 = vld [vmem:[%s2 + $0x128] sm:$0xff]
    %v635 = vld [vmem:[%s2 + $0x130] sm:$0xff]
    %v636 = vld [vmem:[%s2 + $0x138] sm:$0xff]
    %v637 = vld [vmem:[%s2 + $0x140] sm:$0xff]
    %v638 = vld [vmem:[%s2 + $0x148] sm:$0xff]
    %v639 = vld [vmem:[%s2 + $0x150] sm:$0xff]
    %v640 = vld [vmem:[%s2 + $0x158] sm:$0xff]
    %v641 = vld [vmem:[%s2 + $0x160] sm:$0xff]
    %v642 = vld [vmem:[%s2 + $0x168] sm:$0xff]
    %v643 = vld [vmem:[%s2 + $0x170] sm:$0xff]
    %v644 = vld [vmem:[%s2 + $0x178] sm:$0xff]
    %v645 = vld [vmem:[%s2 + $0x180] sm:$0xff]
    %v646 = vld [vmem:[%s2 + $0x188] sm:$0xff]
    %v647 = vld [vmem:[%s2 + $0x190] sm:$0xff]
    %v648 = vld [vmem:[%s2 + $0x198] sm:$0xff]
    %v649 = vld [vmem:[%s2 + $0x1a0] sm:$0xff]
    %v650 = vld [vmem:[%s2 + $0x1a8] sm:$0xff]
    %v651 = vld [vmem:[%s2 + $0x1b0] sm:$0xff]
    %v652 = vld [vmem:[%s2 + $0x1b8] sm:$0xff]
    %v653 = vld [vmem:[%s2 + $0x1c0] sm:$0xff]
    %v654 = vld [vmem:[%s2 + $0x1c8] sm:$0xff]
    %v655 = vld [vmem:[%s2 + $0x1d0] sm:$0xff]
    %v656 = vld [vmem:[%s2 + $0x1d8] sm:$0xff]
    %v657 = vld [vmem:[%s2 + $0x1e0] sm:$0xff]
    %v658 = vld [vmem:[%s2 + $0x1e8] sm:$0xff]
    %v659 = vld [vmem:[%s2 + $0x1f0] sm:$0xff]
    %v660 = vld [vmem:[%s2 + $0x1f8] sm:$0xff]
    %v661 = vld [vmem:[%s3] sm:$0x3]
    %v663 = vlaneseq
    %v664 = vshrl.u32 %v663, 7
    %v665 = vsub.s32 0, %v664
    %v666 = vrot.slane %v661, %v665
    %v667 = vlaneseq
    %v668 = vshrl.u32 %v667, 7
    %v669 = vsub.s32 1, %v668
    %v670 = vrot.slane %v661, %v669
    %673 = vmatprep.subr.mxu0 %v598
    %674 = vmatpush1.xpose.msra.mxu0 %v597
    %675 = vmatprep.subr.mxu0 %v600
    %676 = vmatpush1.xpose.msra.mxu0 %v599
    %677 = vmatprep.subr.mxu0 %v602
    %678 = vmatpush1.xpose.msra.mxu0 %v601
    %679 = vmatprep.subr.mxu0 %v604
    %680 = vmatpush1.xpose.msra.mxu0 %v603
    %681 = vmatprep.subr.mxu0 %v606
    %682 = vmatpush1.xpose.msra.mxu0 %v605
    %683 = vmatprep.subr.mxu0 %v608
    %684 = vmatpush1.xpose.msra.mxu0 %v607
    %685 = vmatprep.subr.mxu0 %v610
    %686 = vmatpush1.xpose.msra.mxu0 %v609
    %687 = vmatprep.subr.mxu0 %v612
    %688 = vmatpush1.xpose.msra.mxu0 %v611
    %689 = vmatprep.subr.mxu0 %v614
    %690 = vmatpush1.xpose.msra.mxu0 %v613
    %691 = vmatprep.subr.mxu0 %v616
    %692 = vmatpush1.xpose.msra.mxu0 %v615
    %693 = vmatprep.subr.mxu0 %v618
    %694 = vmatpush1.xpose.msra.mxu0 %v617
    %695 = vmatprep.subr.mxu0 %v620
    %696 = vmatpush1.xpose.msra.mxu0 %v619
    %697 = vmatprep.subr.mxu0 %v622
    %698 = vmatpush1.xpose.msra.mxu0 %v621
    %699 = vmatprep.subr.mxu0 %v624
    %700 = vmatpush1.xpose.msra.mxu0 %v623
    %701 = vmatprep.subr.mxu0 %v626
    %702 = vmatpush1.xpose.msra.mxu0 %v625
    %703 = vmatprep.subr.mxu0 %v628
    %704 = vmatpush1.xpose.msra.mxu0 %v627
    %705 = vmatprep.subr.mxu0 %v630
    %706 = vmatpush1.xpose.msra.mxu0 %v629
    %707 = vmatprep.subr.mxu0 %v632
    %708 = vmatpush1.xpose.msra.mxu0 %v631
    %709 = vmatprep.subr.mxu0 %v634
    %710 = vmatpush1.xpose.msra.mxu0 %v633
    %711 = vmatprep.subr.mxu0 %v636
    %712 = vmatpush1.xpose.msra.mxu0 %v635
    %713 = vmatprep.subr.mxu0 %v638
    %714 = vmatpush1.xpose.msra.mxu0 %v637
    %715 = vmatprep.subr.mxu0 %v640
    %716 = vmatpush1.xpose.msra.mxu0 %v639
    %717 = vmatprep.subr.mxu0 %v642
    %718 = vmatpush1.xpose.msra.mxu0 %v641
    %719 = vmatprep.subr.mxu0 %v644
    %720 = vmatpush1.xpose.msra.mxu0 %v643
    %721 = vmatprep.subr.mxu0 %v646
    %722 = vmatpush1.xpose.msra.mxu0 %v645
    %723 = vmatprep.subr.mxu0 %v648
    %724 = vmatpush1.xpose.msra.mxu0 %v647
    %725 = vmatprep.subr.mxu0 %v650
    %726 = vmatpush1.xpose.msra.mxu0 %v649
    %727 = vmatprep.subr.mxu0 %v652
    %728 = vmatpush1.xpose.msra.mxu0 %v651
    %729 = vmatprep.subr.mxu0 %v654
    %730 = vmatpush1.xpose.msra.mxu0 %v653
    %731 = vmatprep.subr.mxu0 %v656
    %732 = vmatpush1.xpose.msra.mxu0 %v655
    %733 = vmatprep.subr.mxu0 %v658
    %734 = vmatpush1.xpose.msra.mxu0 %v657
    %735 = vmatprep.subr.mxu0 %v660
    %736 = vmatpush1.xpose.msra.mxu0 %v659
    %737 = vmatprep.mubr.f32.mxu0 %v595
    %738 = vmatmul.mubr.f32.gmra.mrb[0].mxu0 %v593
    %v739 = vpop.f32.mrb[0].mxu0
    %v740 = vadd.f32 %v666, %v739
    %v741 = vpop.f32.mrb[0].mxu0
    %v742 = vadd.f32 %v670, %v741
    %743 = vdwg.mxu0
    %v744 = vsub.f32 %v522, %v740
    %v745 = vsub.f32 %v524, %v742
    %v746 = vmul.f32 %v744, %v744
    %v747 = vmul.f32 %v745, %v745
    %vm748 = vcmask 1041408
    %v749 = vsel %vm748, %v746, 0.0
    %v750 = vsel %vm748, %v747, 0.0
    %v751 = vadd.f32 %v749, %v750
    %752 = vadd.xlane.f32.xlu0 %v751
    %v753 = vpop.xlane.xlu0 %752
    %v754 = vrot.slane %v753, 4
    %v755 = vadd.f32 %v753, %v754
    %v756 = vrot.slane %v755, 2
    %v757 = vadd.f32 %v755, %v756
    %v758 = vrot.slane %v757, 1
    %v759 = vadd.f32 %v757, %v758
    %s760 = vtos %v759
    %761 = vmatprep.subr.mxu0 0.0
    %762 = vmatpush1.msra.mxu0 1.0
    %763 = vmatprep.subr.mxu0 0.0
    %764 = vmatpush1.msra.mxu0 1.0
    %765 = vmatprep.subr.mxu0 0.0
    %766 = vmatpush1.msra.mxu0 1.0
    %767 = vmatprep.subr.mxu0 0.0
    %768 = vmatpush1.msra.mxu0 1.0
    %769 = vmatprep.subr.mxu0 0.0
    %770 = vmatpush1.msra.mxu0 1.0
    %771 = vmatprep.subr.mxu0 0.0
    %772 = vmatpush1.msra.mxu0 1.0
    %773 = vmatprep.subr.mxu0 0.0
    %774 = vmatpush1.msra.mxu0 1.0
    %775 = vmatprep.subr.mxu0 0.0
    %776 = vmatpush1.msra.mxu0 1.0
    %777 = vmatprep.subr.mxu0 0.0
    %778 = vmatpush1.msra.mxu0 1.0
    %779 = vmatprep.subr.mxu0 0.0
    %780 = vmatpush1.msra.mxu0 1.0
    %781 = vmatprep.subr.mxu0 0.0
    %782 = vmatpush1.msra.mxu0 1.0
    %783 = vmatprep.subr.mxu0 0.0
    %784 = vmatpush1.msra.mxu0 1.0
    %785 = vmatprep.subr.mxu0 0.0
    %786 = vmatpush1.msra.mxu0 1.0
    %787 = vmatprep.subr.mxu0 0.0
    %788 = vmatpush1.msra.mxu0 1.0
    %789 = vmatprep.subr.mxu0 0.0
    %790 = vmatpush1.msra.mxu0 1.0
    %791 = vmatprep.subr.mxu0 0.0
    %792 = vmatpush1.msra.mxu0 1.0
    %793 = vmatprep.subr.mxu0 0.0
    %794 = vmatpush1.msra.mxu0 1.0
    %795 = vmatprep.subr.mxu0 0.0
    %796 = vmatpush1.msra.mxu0 1.0
    %797 = vmatprep.subr.mxu0 0.0
    %798 = vmatpush1.msra.mxu0 1.0
    %799 = vmatprep.subr.mxu0 0.0
    %800 = vmatpush1.msra.mxu0 1.0
    %801 = vmatprep.subr.mxu0 0.0
    %802 = vmatpush1.msra.mxu0 1.0
    %803 = vmatprep.subr.mxu0 0.0
    %804 = vmatpush1.msra.mxu0 1.0
    %805 = vmatprep.subr.mxu0 0.0
    %806 = vmatpush1.msra.mxu0 1.0
    %807 = vmatprep.subr.mxu0 0.0
    %808 = vmatpush1.msra.mxu0 1.0
    %809 = vmatprep.subr.mxu0 0.0
    %810 = vmatpush1.msra.mxu0 1.0
    %811 = vmatprep.subr.mxu0 0.0
    %812 = vmatpush1.msra.mxu0 1.0
    %813 = vmatprep.subr.mxu0 0.0
    %814 = vmatpush1.msra.mxu0 1.0
    %815 = vmatprep.subr.mxu0 0.0
    %816 = vmatpush1.msra.mxu0 1.0
    %817 = vmatprep.subr.mxu0 0.0
    %818 = vmatpush1.msra.mxu0 1.0
    %819 = vmatprep.subr.mxu0 0.0
    %820 = vmatpush1.msra.mxu0 1.0
    %821 = vmatprep.subr.mxu0 0.0
    %822 = vmatpush1.msra.mxu0 1.0
    %823 = vmatprep.subr.mxu0 0.0
    %824 = vmatpush1.msra.mxu0 1.0
    %825 = vmatprep.mubr.f32.mxu0 %v29
    %826 = vmatmul.mubr.f32.gmra.mrb[0].mxu0 %v28
    %v827 = vpop.f32.mrb[0].mxu0
    %v828 = vadd.f32 0.0, %v827
    %v829 = vpop.f32.mrb[0].mxu0
    %830 = vmatprep.mubr.f32.mxu0 %v31
    %831 = vmatmul.mubr.f32.gmra.mrb[0].mxu0 %v30
    %v832 = vpop.f32.mrb[0].mxu0
    %v833 = vadd.f32 0.0, %v832
    %v834 = vpop.f32.mrb[0].mxu0
    %835 = vmatprep.mubr.f32.mxu0 %v33
    %836 = vmatmul.mubr.f32.gmra.mrb[0].mxu0 %v32
    %v837 = vpop.f32.mrb[0].mxu0
    %v838 = vadd.f32 0.0, %v837
    %v839 = vpop.f32.mrb[0].mxu0
    %840 = vmatprep.mubr.f32.mxu0 %v35
    %841 = vmatmul.mubr.f32.gmra.mrb[0].mxu0 %v34
    %v842 = vpop.f32.mrb[0].mxu0
    %v843 = vadd.f32 0.0, %v842
    %v844 = vpop.f32.mrb[0].mxu0
    %845 = vmatprep.mubr.f32.mxu0 %v37
    %846 = vmatmul.mubr.f32.gmra.mrb[0].mxu0 %v36
    %v847 = vpop.f32.mrb[0].mxu0
    %v848 = vadd.f32 0.0, %v847
    %v849 = vpop.f32.mrb[0].mxu0
    %850 = vmatprep.mubr.f32.mxu0 %v39
    %851 = vmatmul.mubr.f32.gmra.mrb[0].mxu0 %v38
    %v852 = vpop.f32.mrb[0].mxu0
    %v853 = vadd.f32 0.0, %v852
    %v854 = vpop.f32.mrb[0].mxu0
    %855 = vmatprep.mubr.f32.mxu0 %v41
    %856 = vmatmul.mubr.f32.gmra.mrb[0].mxu0 %v40
    %v857 = vpop.f32.mrb[0].mxu0
    %v858 = vadd.f32 0.0, %v857
    %v859 = vpop.f32.mrb[0].mxu0
    %860 = vmatprep.mubr.f32.mxu0 %v43
    %861 = vmatmul.mubr.f32.gmra.mrb[0].mxu0 %v42
    %v862 = vpop.f32.mrb[0].mxu0
    %v863 = vadd.f32 0.0, %v862
    %v864 = vpop.f32.mrb[0].mxu0
    %865 = vmatprep.mubr.f32.mxu0 %v45
    %866 = vmatmul.mubr.f32.gmra.mrb[0].mxu0 %v44
    %v867 = vpop.f32.mrb[0].mxu0
    %v868 = vadd.f32 0.0, %v867
    %v869 = vpop.f32.mrb[0].mxu0
    %870 = vmatprep.mubr.f32.mxu0 %v47
    %871 = vmatmul.mubr.f32.gmra.mrb[0].mxu0 %v46
    %v872 = vpop.f32.mrb[0].mxu0
    %v873 = vadd.f32 0.0, %v872
    %v874 = vpop.f32.mrb[0].mxu0
    %875 = vmatprep.mubr.f32.mxu0 %v49
    %876 = vmatmul.mubr.f32.gmra.mrb[0].mxu0 %v48
    %v877 = vpop.f32.mrb[0].mxu0
    %v878 = vadd.f32 0.0, %v877
    %v879 = vpop.f32.mrb[0].mxu0
    %880 = vmatprep.mubr.f32.mxu0 %v51
    %881 = vmatmul.mubr.f32.gmra.mrb[0].mxu0 %v50
    %v882 = vpop.f32.mrb[0].mxu0
    %v883 = vadd.f32 0.0, %v882
    %v884 = vpop.f32.mrb[0].mxu0
    %885 = vmatprep.mubr.f32.mxu0 %v53
    %886 = vmatmul.mubr.f32.gmra.mrb[0].mxu0 %v52
    %v887 = vpop.f32.mrb[0].mxu0
    %v888 = vadd.f32 0.0, %v887
    %v889 = vpop.f32.mrb[0].mxu0
    %890 = vmatprep.mubr.f32.mxu0 %v55
    %891 = vmatmul.mubr.f32.gmra.mrb[0].mxu0 %v54
    %v892 = vpop.f32.mrb[0].mxu0
    %v893 = vadd.f32 0.0, %v892
    %v894 = vpop.f32.mrb[0].mxu0
    %895 = vmatprep.mubr.f32.mxu0 %v57
    %896 = vmatmul.mubr.f32.gmra.mrb[0].mxu0 %v56
    %v897 = vpop.f32.mrb[0].mxu0
    %v898 = vadd.f32 0.0, %v897
    %v899 = vpop.f32.mrb[0].mxu0
    %900 = vmatprep.mubr.f32.mxu0 %v59
    %901 = vmatmul.mubr.f32.gmra.mrb[0].mxu0 %v58
    %v902 = vpop.f32.mrb[0].mxu0
    %v903 = vadd.f32 0.0, %v902
    %v904 = vpop.f32.mrb[0].mxu0
    %905 = vdwg.mxu0
    %v906 = vmul.f32 %v828, 0.00390625
    %v907 = vmul.f32 %v833, 0.00390625
    %v908 = vmul.f32 %v838, 0.00390625
    %v909 = vmul.f32 %v843, 0.00390625
    %v910 = vmul.f32 %v848, 0.00390625
    %v911 = vmul.f32 %v853, 0.00390625
    %v912 = vmul.f32 %v858, 0.00390625
    %v913 = vmul.f32 %v863, 0.00390625
    %v914 = vmul.f32 %v868, 0.00390625
    %v915 = vmul.f32 %v873, 0.00390625
    %v916 = vmul.f32 %v878, 0.00390625
    %v917 = vmul.f32 %v883, 0.00390625
    %v918 = vmul.f32 %v888, 0.00390625
    %v919 = vmul.f32 %v893, 0.00390625
    %v920 = vmul.f32 %v898, 0.00390625
    %v921 = vmul.f32 %v903, 0.00390625
    %922 = vmatprep.subr.mxu0 0.0
    %923 = vmatpush1.msra.mxu0 1.0
    %924 = vmatprep.subr.mxu0 0.0
    %925 = vmatpush1.msra.mxu0 1.0
    %926 = vmatprep.subr.mxu0 0.0
    %927 = vmatpush1.msra.mxu0 1.0
    %928 = vmatprep.subr.mxu0 0.0
    %929 = vmatpush1.msra.mxu0 1.0
    %930 = vmatprep.subr.mxu0 0.0
    %931 = vmatpush1.msra.mxu0 1.0
    %932 = vmatprep.subr.mxu0 0.0
    %933 = vmatpush1.msra.mxu0 1.0
    %934 = vmatprep.subr.mxu0 0.0
    %935 = vmatpush1.msra.mxu0 1.0
    %936 = vmatprep.subr.mxu0 0.0
    %937 = vmatpush1.msra.mxu0 1.0
    %938 = vmatprep.subr.mxu0 0.0
    %939 = vmatpush1.msra.mxu0 1.0
    %940 = vmatprep.subr.mxu0 0.0
    %941 = vmatpush1.msra.mxu0 1.0
    %942 = vmatprep.subr.mxu0 0.0
    %943 = vmatpush1.msra.mxu0 1.0
    %944 = vmatprep.subr.mxu0 0.0
    %945 = vmatpush1.msra.mxu0 1.0
    %946 = vmatprep.subr.mxu0 0.0
    %947 = vmatpush1.msra.mxu0 1.0
    %948 = vmatprep.subr.mxu0 0.0
    %949 = vmatpush1.msra.mxu0 1.0
    %950 = vmatprep.subr.mxu0 0.0
    %951 = vmatpush1.msra.mxu0 1.0
    %952 = vmatprep.subr.mxu0 0.0
    %953 = vmatpush1.msra.mxu0 1.0
    %954 = vmatprep.subr.mxu0 0.0
    %955 = vmatpush1.msra.mxu0 1.0
    %956 = vmatprep.subr.mxu0 0.0
    %957 = vmatpush1.msra.mxu0 1.0
    %958 = vmatprep.subr.mxu0 0.0
    %959 = vmatpush1.msra.mxu0 1.0
    %960 = vmatprep.subr.mxu0 0.0
    %961 = vmatpush1.msra.mxu0 1.0
    %962 = vmatprep.subr.mxu0 0.0
    %963 = vmatpush1.msra.mxu0 1.0
    %964 = vmatprep.subr.mxu0 0.0
    %965 = vmatpush1.msra.mxu0 1.0
    %966 = vmatprep.subr.mxu0 0.0
    %967 = vmatpush1.msra.mxu0 1.0
    %968 = vmatprep.subr.mxu0 0.0
    %969 = vmatpush1.msra.mxu0 1.0
    %970 = vmatprep.subr.mxu0 0.0
    %971 = vmatpush1.msra.mxu0 1.0
    %972 = vmatprep.subr.mxu0 0.0
    %973 = vmatpush1.msra.mxu0 1.0
    %974 = vmatprep.subr.mxu0 0.0
    %975 = vmatpush1.msra.mxu0 1.0
    %976 = vmatprep.subr.mxu0 0.0
    %977 = vmatpush1.msra.mxu0 1.0
    %978 = vmatprep.subr.mxu0 0.0
    %979 = vmatpush1.msra.mxu0 1.0
    %980 = vmatprep.subr.mxu0 0.0
    %981 = vmatpush1.msra.mxu0 1.0
    %982 = vmatprep.subr.mxu0 0.0
    %983 = vmatpush1.msra.mxu0 1.0
    %984 = vmatprep.subr.mxu0 0.0
    %985 = vmatpush1.msra.mxu0 1.0
    %986 = vmatprep.mubr.f32.mxu0 %v61
    %987 = vmatmul.mubr.f32.gmra.mrb[0].mxu0 %v60
    %v988 = vpop.f32.mrb[0].mxu0
    %v989 = vadd.f32 0.0, %v988
    %v990 = vpop.f32.mrb[0].mxu0
    %991 = vmatprep.mubr.f32.mxu0 %v63
    %992 = vmatmul.mubr.f32.gmra.mrb[0].mxu0 %v62
    %v993 = vpop.f32.mrb[0].mxu0
    %v994 = vadd.f32 0.0, %v993
    %v995 = vpop.f32.mrb[0].mxu0
    %996 = vmatprep.mubr.f32.mxu0 %v65
    %997 = vmatmul.mubr.f32.gmra.mrb[0].mxu0 %v64
    %v998 = vpop.f32.mrb[0].mxu0
    %v999 = vadd.f32 0.0, %v998
    %v1000 = vpop.f32.mrb[0].mxu0
    %1001 = vmatprep.mubr.f32.mxu0 %v67
    %1002 = vmatmul.mubr.f32.gmra.mrb[0].mxu0 %v66
    %v1003 = vpop.f32.mrb[0].mxu0
    %v1004 = vadd.f32 0.0, %v1003
    %v1005 = vpop.f32.mrb[0].mxu0
    %1006 = vmatprep.mubr.f32.mxu0 %v69
    %1007 = vmatmul.mubr.f32.gmra.mrb[0].mxu0 %v68
    %v1008 = vpop.f32.mrb[0].mxu0
    %v1009 = vadd.f32 0.0, %v1008
    %v1010 = vpop.f32.mrb[0].mxu0
    %1011 = vmatprep.mubr.f32.mxu0 %v71
    %1012 = vmatmul.mubr.f32.gmra.mrb[0].mxu0 %v70
    %v1013 = vpop.f32.mrb[0].mxu0
    %v1014 = vadd.f32 0.0, %v1013
    %v1015 = vpop.f32.mrb[0].mxu0
    %1016 = vmatprep.mubr.f32.mxu0 %v73
    %1017 = vmatmul.mubr.f32.gmra.mrb[0].mxu0 %v72
    %v1018 = vpop.f32.mrb[0].mxu0
    %v1019 = vadd.f32 0.0, %v1018
    %v1020 = vpop.f32.mrb[0].mxu0
    %1021 = vmatprep.mubr.f32.mxu0 %v75
    %1022 = vmatmul.mubr.f32.gmra.mrb[0].mxu0 %v74
    %v1023 = vpop.f32.mrb[0].mxu0
    %v1024 = vadd.f32 0.0, %v1023
    %v1025 = vpop.f32.mrb[0].mxu0
    %1026 = vmatprep.mubr.f32.mxu0 %v77
    %1027 = vmatmul.mubr.f32.gmra.mrb[0].mxu0 %v76
    %v1028 = vpop.f32.mrb[0].mxu0
    %v1029 = vadd.f32 0.0, %v1028
    %v1030 = vpop.f32.mrb[0].mxu0
    %1031 = vmatprep.mubr.f32.mxu0 %v79
    %1032 = vmatmul.mubr.f32.gmra.mrb[0].mxu0 %v78
    %v1033 = vpop.f32.mrb[0].mxu0
    %v1034 = vadd.f32 0.0, %v1033
    %v1035 = vpop.f32.mrb[0].mxu0
    %1036 = vmatprep.mubr.f32.mxu0 %v81
    %1037 = vmatmul.mubr.f32.gmra.mrb[0].mxu0 %v80
    %v1038 = vpop.f32.mrb[0].mxu0
    %v1039 = vadd.f32 0.0, %v1038
    %v1040 = vpop.f32.mrb[0].mxu0
    %1041 = vmatprep.mubr.f32.mxu0 %v83
    %1042 = vmatmul.mubr.f32.gmra.mrb[0].mxu0 %v82
    %v1043 = vpop.f32.mrb[0].mxu0
    %v1044 = vadd.f32 0.0, %v1043
    %v1045 = vpop.f32.mrb[0].mxu0
    %1046 = vmatprep.mubr.f32.mxu0 %v85
    %1047 = vmatmul.mubr.f32.gmra.mrb[0].mxu0 %v84
    %v1048 = vpop.f32.mrb[0].mxu0
    %v1049 = vadd.f32 0.0, %v1048
    %v1050 = vpop.f32.mrb[0].mxu0
    %1051 = vmatprep.mubr.f32.mxu0 %v87
    %1052 = vmatmul.mubr.f32.gmra.mrb[0].mxu0 %v86
    %v1053 = vpop.f32.mrb[0].mxu0
    %v1054 = vadd.f32 0.0, %v1053
    %v1055 = vpop.f32.mrb[0].mxu0
    %1056 = vmatprep.mubr.f32.mxu0 %v89
    %1057 = vmatmul.mubr.f32.gmra.mrb[0].mxu0 %v88
    %v1058 = vpop.f32.mrb[0].mxu0
    %v1059 = vadd.f32 0.0, %v1058
    %v1060 = vpop.f32.mrb[0].mxu0
    %1061 = vmatprep.mubr.f32.mxu0 %v91
    %1062 = vmatmul.mubr.f32.gmra.mrb[0].mxu0 %v90
    %v1063 = vpop.f32.mrb[0].mxu0
    %v1064 = vadd.f32 0.0, %v1063
    %v1065 = vpop.f32.mrb[0].mxu0
    %1066 = vdwg.mxu0
    %v1067 = vmul.f32 %v989, 0.00390625
    %v1068 = vmul.f32 %v994, 0.00390625
    %v1069 = vmul.f32 %v999, 0.00390625
    %v1070 = vmul.f32 %v1004, 0.00390625
    %v1071 = vmul.f32 %v1009, 0.00390625
    %v1072 = vmul.f32 %v1014, 0.00390625
    %v1073 = vmul.f32 %v1019, 0.00390625
    %v1074 = vmul.f32 %v1024, 0.00390625
    %v1075 = vmul.f32 %v1029, 0.00390625
    %v1076 = vmul.f32 %v1034, 0.00390625
    %v1077 = vmul.f32 %v1039, 0.00390625
    %v1078 = vmul.f32 %v1044, 0.00390625
    %v1079 = vmul.f32 %v1049, 0.00390625
    %v1080 = vmul.f32 %v1054, 0.00390625
    %v1081 = vmul.f32 %v1059, 0.00390625
    %v1082 = vmul.f32 %v1064, 0.00390625
    %v1083 = vld [vmem:[%s5] sm:$0xff]
    %v1084 = vld [vmem:[%s5 + $0x8] sm:$0xff]
    %v1085 = vld [vmem:[%s5 + $0x10] sm:$0xff]
    %v1086 = vld [vmem:[%s5 + $0x18] sm:$0xff]
    %v1087 = vld [vmem:[%s5 + $0x20] sm:$0xff]
    %v1088 = vld [vmem:[%s5 + $0x28] sm:$0xff]
    %v1089 = vld [vmem:[%s5 + $0x30] sm:$0xff]
    %v1090 = vld [vmem:[%s5 + $0x38] sm:$0xff]
    %v1091 = vld [vmem:[%s5 + $0x40] sm:$0xff]
    %v1092 = vld [vmem:[%s5 + $0x48] sm:$0xff]
    %v1093 = vld [vmem:[%s5 + $0x50] sm:$0xff]
    %v1094 = vld [vmem:[%s5 + $0x58] sm:$0xff]
    %v1095 = vld [vmem:[%s5 + $0x60] sm:$0xff]
    %v1096 = vld [vmem:[%s5 + $0x68] sm:$0xff]
    %v1097 = vld [vmem:[%s5 + $0x70] sm:$0xff]
    %v1098 = vld [vmem:[%s5 + $0x78] sm:$0xff]
    %s1099 = sld [smem:[#allocation2]]
    %v1100 = vstv %s1099
    %1101 = vmatprep.subr.mxu0 0.0
    %1102 = vmatpush1.msra.mxu0 %v1067
    %1103 = vmatprep.subr.mxu0 0.0
    %1104 = vmatpush1.msra.mxu0 %v1068
    %1105 = vmatprep.subr.mxu0 0.0
    %1106 = vmatpush1.msra.mxu0 %v1069
    %1107 = vmatprep.subr.mxu0 0.0
    %1108 = vmatpush1.msra.mxu0 %v1070
    %1109 = vmatprep.subr.mxu0 0.0
    %1110 = vmatpush1.msra.mxu0 %v1071
    %1111 = vmatprep.subr.mxu0 0.0
    %1112 = vmatpush1.msra.mxu0 %v1072
    %1113 = vmatprep.subr.mxu0 0.0
    %1114 = vmatpush1.msra.mxu0 %v1073
    %1115 = vmatprep.subr.mxu0 0.0
    %1116 = vmatpush1.msra.mxu0 %v1074
    %1117 = vmatprep.subr.mxu0 0.0
    %1118 = vmatpush1.msra.mxu0 %v1075
    %1119 = vmatprep.subr.mxu0 0.0
    %1120 = vmatpush1.msra.mxu0 %v1076
    %1121 = vmatprep.subr.mxu0 0.0
    %1122 = vmatpush1.msra.mxu0 %v1077
    %1123 = vmatprep.subr.mxu0 0.0
    %1124 = vmatpush1.msra.mxu0 %v1078
    %1125 = vmatprep.subr.mxu0 0.0
    %1126 = vmatpush1.msra.mxu0 %v1079
    %1127 = vmatprep.subr.mxu0 0.0
    %1128 = vmatpush1.msra.mxu0 %v1080
    %1129 = vmatprep.subr.mxu0 0.0
    %1130 = vmatpush1.msra.mxu0 %v1081
    %1131 = vmatprep.subr.mxu0 0.0
    %1132 = vmatpush1.msra.mxu0 %v1082
    %1133 = vmatprep.subr.mxu0 0.0
    %1134 = vmatpush1.msra.mxu0 0.0
    %1135 = vmatprep.subr.mxu0 0.0
    %1136 = vmatpush1.msra.mxu0 0.0
    %1137 = vmatprep.subr.mxu0 0.0
    %1138 = vmatpush1.msra.mxu0 0.0
    %1139 = vmatprep.subr.mxu0 0.0
    %1140 = vmatpush1.msra.mxu0 0.0
    %1141 = vmatprep.subr.mxu0 0.0
    %1142 = vmatpush1.msra.mxu0 0.0
    %1143 = vmatprep.subr.mxu0 0.0
    %1144 = vmatpush1.msra.mxu0 0.0
    %1145 = vmatprep.subr.mxu0 0.0
    %1146 = vmatpush1.msra.mxu0 0.0
    %1147 = vmatprep.subr.mxu0 0.0
    %1148 = vmatpush1.msra.mxu0 0.0
    %1149 = vmatprep.subr.mxu0 0.0
    %1150 = vmatpush1.msra.mxu0 0.0
    %1151 = vmatprep.subr.mxu0 0.0
    %1152 = vmatpush1.msra.mxu0 0.0
    %1153 = vmatprep.subr.mxu0 0.0
    %1154 = vmatpush1.msra.mxu0 0.0
    %1155 = vmatprep.subr.mxu0 0.0
    %1156 = vmatpush1.msra.mxu0 0.0
    %1157 = vmatprep.subr.mxu0 0.0
    %1158 = vmatpush1.msra.mxu0 0.0
    %1159 = vmatprep.subr.mxu0 0.0
    %1160 = vmatpush1.msra.mxu0 0.0
    %1161 = vmatprep.subr.mxu0 0.0
    %1162 = vmatpush1.msra.mxu0 0.0
    %1163 = vmatprep.subr.mxu0 0.0
    %1164 = vmatpush1.msra.mxu0 0.0
    %1165 = vmatprep.mubr.f32.mxu0 0.0
    %1166 = vmatmul.mubr.f32.gmra.mrb[0].mxu0 %v1083
    %v1167 = vpop.f32.mrb[0].mxu0
    %v1168 = vadd.f32 %v1100, %v1167
    %v1169 = vpop.f32.mrb[0].mxu0
    %1170 = vmatprep.mubr.f32.mxu0 0.0
    %1171 = vmatmul.mubr.f32.gmra.mrb[0].mxu0 %v1084
    %v1172 = vpop.f32.mrb[0].mxu0
    %v1173 = vadd.f32 %v1100, %v1172
    %v1174 = vpop.f32.mrb[0].mxu0
    %1175 = vmatprep.mubr.f32.mxu0 0.0
    %1176 = vmatmul.mubr.f32.gmra.mrb[0].mxu0 %v1085
    %v1177 = vpop.f32.mrb[0].mxu0
    %v1178 = vadd.f32 %v1100, %v1177
    %v1179 = vpop.f32.mrb[0].mxu0
    %1180 = vmatprep.mubr.f32.mxu0 0.0
    %1181 = vmatmul.mubr.f32.gmra.mrb[0].mxu0 %v1086
    %v1182 = vpop.f32.mrb[0].mxu0
    %v1183 = vadd.f32 %v1100, %v1182
    %v1184 = vpop.f32.mrb[0].mxu0
    %1185 = vmatprep.mubr.f32.mxu0 0.0
    %1186 = vmatmul.mubr.f32.gmra.mrb[0].mxu0 %v1087
    %v1187 = vpop.f32.mrb[0].mxu0
    %v1188 = vadd.f32 %v1100, %v1187
    %v1189 = vpop.f32.mrb[0].mxu0
    %1190 = vmatprep.mubr.f32.mxu0 0.0
    %1191 = vmatmul.mubr.f32.gmra.mrb[0].mxu0 %v1088
    %v1192 = vpop.f32.mrb[0].mxu0
    %v1193 = vadd.f32 %v1100, %v1192
    %v1194 = vpop.f32.mrb[0].mxu0
    %1195 = vmatprep.mubr.f32.mxu0 0.0
    %1196 = vmatmul.mubr.f32.gmra.mrb[0].mxu0 %v1089
    %v1197 = vpop.f32.mrb[0].mxu0
    %v1198 = vadd.f32 %v1100, %v1197
    %v1199 = vpop.f32.mrb[0].mxu0
    %1200 = vmatprep.mubr.f32.mxu0 0.0
    %1201 = vmatmul.mubr.f32.gmra.mrb[0].mxu0 %v1090
    %v1202 = vpop.f32.mrb[0].mxu0
    %v1203 = vadd.f32 %v1100, %v1202
    %v1204 = vpop.f32.mrb[0].mxu0
    %1205 = vmatprep.mubr.f32.mxu0 0.0
    %1206 = vmatmul.mubr.f32.gmra.mrb[0].mxu0 %v1091
    %v1207 = vpop.f32.mrb[0].mxu0
    %v1208 = vadd.f32 %v1100, %v1207
    %v1209 = vpop.f32.mrb[0].mxu0
    %1210 = vmatprep.mubr.f32.mxu0 0.0
    %1211 = vmatmul.mubr.f32.gmra.mrb[0].mxu0 %v1092
    %v1212 = vpop.f32.mrb[0].mxu0
    %v1213 = vadd.f32 %v1100, %v1212
    %v1214 = vpop.f32.mrb[0].mxu0
    %1215 = vmatprep.mubr.f32.mxu0 0.0
    %1216 = vmatmul.mubr.f32.gmra.mrb[0].mxu0 %v1093
    %v1217 = vpop.f32.mrb[0].mxu0
    %v1218 = vadd.f32 %v1100, %v1217
    %v1219 = vpop.f32.mrb[0].mxu0
    %1220 = vmatprep.mubr.f32.mxu0 0.0
    %1221 = vmatmul.mubr.f32.gmra.mrb[0].mxu0 %v1094
    %v1222 = vpop.f32.mrb[0].mxu0
    %v1223 = vadd.f32 %v1100, %v1222
    %v1224 = vpop.f32.mrb[0].mxu0
    %1225 = vmatprep.mubr.f32.mxu0 0.0
    %1226 = vmatmul.mubr.f32.gmra.mrb[0].mxu0 %v1095
    %v1227 = vpop.f32.mrb[0].mxu0
    %v1228 = vadd.f32 %v1100, %v1227
    %v1229 = vpop.f32.mrb[0].mxu0
    %1230 = vmatprep.mubr.f32.mxu0 0.0
    %1231 = vmatmul.mubr.f32.gmra.mrb[0].mxu0 %v1096
    %v1232 = vpop.f32.mrb[0].mxu0
    %v1233 = vadd.f32 %v1100, %v1232
    %v1234 = vpop.f32.mrb[0].mxu0
    %1235 = vmatprep.mubr.f32.mxu0 0.0
    %1236 = vmatmul.mubr.f32.gmra.mrb[0].mxu0 %v1097
    %v1237 = vpop.f32.mrb[0].mxu0
    %v1238 = vadd.f32 %v1100, %v1237
    %v1239 = vpop.f32.mrb[0].mxu0
    %1240 = vmatprep.mubr.f32.mxu0 0.0
    %1241 = vmatmul.mubr.f32.gmra.mrb[0].mxu0 %v1098
    %v1242 = vpop.f32.mrb[0].mxu0
    %v1243 = vadd.f32 %v1100, %v1242
    %v1244 = vpop.f32.mrb[0].mxu0
    %1245 = vdwg.mxu0
    %v1246 = vsub.f32 %v906, %v1168
    %v1247 = vsub.f32 %v907, %v1173
    %v1248 = vsub.f32 %v908, %v1178
    %v1249 = vsub.f32 %v909, %v1183
    %v1250 = vsub.f32 %v910, %v1188
    %v1251 = vsub.f32 %v911, %v1193
    %v1252 = vsub.f32 %v912, %v1198
    %v1253 = vsub.f32 %v913, %v1203
    %v1254 = vsub.f32 %v914, %v1208
    %v1255 = vsub.f32 %v915, %v1213
    %v1256 = vsub.f32 %v916, %v1218
    %v1257 = vsub.f32 %v917, %v1223
    %v1258 = vsub.f32 %v918, %v1228
    %v1259 = vsub.f32 %v919, %v1233
    %v1260 = vsub.f32 %v920, %v1238
    %v1261 = vsub.f32 %v921, %v1243
    %v1262 = vmul.f32 %v1246, %v1246
    %v1263 = vmul.f32 %v1247, %v1247
    %v1264 = vmul.f32 %v1248, %v1248
    %v1265 = vmul.f32 %v1249, %v1249
    %v1266 = vmul.f32 %v1250, %v1250
    %v1267 = vmul.f32 %v1251, %v1251
    %v1268 = vmul.f32 %v1252, %v1252
    %v1269 = vmul.f32 %v1253, %v1253
    %v1270 = vmul.f32 %v1254, %v1254
    %v1271 = vmul.f32 %v1255, %v1255
    %v1272 = vmul.f32 %v1256, %v1256
    %v1273 = vmul.f32 %v1257, %v1257
    %v1274 = vmul.f32 %v1258, %v1258
    %v1275 = vmul.f32 %v1259, %v1259
    %v1276 = vmul.f32 %v1260, %v1260
    %v1277 = vmul.f32 %v1261, %v1261
    %v1278 = vsel %vm413, %v1262, 0.0
    %v1279 = vsel %vm413, %v1263, 0.0
    %v1280 = vadd.f32 %v1278, %v1279
    %v1281 = vsel %vm413, %v1264, 0.0
    %v1282 = vadd.f32 %v1280, %v1281
    %v1283 = vsel %vm413, %v1265, 0.0
    %v1284 = vadd.f32 %v1282, %v1283
    %v1285 = vsel %vm413, %v1266, 0.0
    %v1286 = vadd.f32 %v1284, %v1285
    %v1287 = vsel %vm413, %v1267, 0.0
    %v1288 = vadd.f32 %v1286, %v1287
    %v1289 = vsel %vm413, %v1268, 0.0
    %v1290 = vadd.f32 %v1288, %v1289
    %v1291 = vsel %vm413, %v1269, 0.0
    %v1292 = vadd.f32 %v1290, %v1291
    %v1293 = vsel %vm413, %v1270, 0.0
    %v1294 = vadd.f32 %v1292, %v1293
    %v1295 = vsel %vm413, %v1271, 0.0
    %v1296 = vadd.f32 %v1294, %v1295
    %v1297 = vsel %vm413, %v1272, 0.0
    %v1298 = vadd.f32 %v1296, %v1297
    %v1299 = vsel %vm413, %v1273, 0.0
    %v1300 = vadd.f32 %v1298, %v1299
    %v1301 = vsel %vm413, %v1274, 0.0
    %v1302 = vadd.f32 %v1300, %v1301
    %v1303 = vsel %vm413, %v1275, 0.0
    %v1304 = vadd.f32 %v1302, %v1303
    %v1305 = vsel %vm413, %v1276, 0.0
    %v1306 = vadd.f32 %v1304, %v1305
    %v1307 = vsel %vm413, %v1277, 0.0
    %v1308 = vadd.f32 %v1306, %v1307
    %1309 = vadd.xlane.f32.xlu0 %v1308
    %v1310 = vpop.xlane.xlu0 %1309
    %v1311 = vrot.slane %v1310, 4
    %v1312 = vadd.f32 %v1310, %v1311
    %v1313 = vrot.slane %v1312, 2
    %v1314 = vadd.f32 %v1312, %v1313
    %v1315 = vrot.slane %v1314, 1
    %v1316 = vadd.f32 %v1314, %v1315
    %s1317 = vtos %v1316
    %s1318 = smul.f32 %s453, 0.0001
    %v1319 = vstv %s760
    %v1320 = vrsqrt.pop %v1319
    %v1321 = vmul.f32 %v1319, %v1320
    %vm1322 = vcmp.eq.f32.partialorder %v1319, inf
    %v1323 = vsel %vm1322, %v1319, %v1321
    %vm1324 = vcmp.eq.f32.partialorder %v1319, 0.0
    %v1325 = vand.u32 %v1319, 2147483648
    %v1326 = vsel %vm1324, %v1325, %v1323
    %s1327 = vtos %v1326
    %s1328 = smul.f32 %s1327, 0.2
    %s1329 = sadd.f32 %s1318, %s1328
    %v1330 = vstv %s1317
    %v1331 = vrsqrt.pop %v1330
    %v1332 = vmul.f32 %v1330, %v1331
    %vm1333 = vcmp.eq.f32.partialorder %v1330, inf
    %v1334 = vsel %vm1333, %v1330, %v1332
    %vm1335 = vcmp.eq.f32.partialorder %v1330, 0.0
    %v1336 = vand.u32 %v1330, 2147483648
    %v1337 = vsel %vm1335, %v1336, %v1334
    %s1338 = vtos %v1337
    %s1339 = smul.f32 %s1338, 0.02
    %s1340 = sadd.f32 %s1329, %s1339
    %v1341 = vstv %s1340
    %vm1342 = vcmask 0
    %1343 = vst.msk [vmem:[#allocation3] sm:$0x1] %vm1342, %v1341
    // Predicated region
    $region30: #{pkt_loss.1} parent=1 // pred_check
      _
    $region31: #{pkt_loss.1} parent=1 // pred_check_branch
      %1345 = sbr.rel (0) target = $region33
    $region32: #{pkt_loss.1} parent=1 // pred_region
      %s1347 = ssub.s32 16, 16
      %1348 = vsyncadd [#allocation4], %s1347
      %s1350 = sshll.u32 [#allocation3], 4
      %s1351 = int_to_ptr.vmem [resolvable:$true] %s1350
      %1353 = dma.vmem_to_hbm [thread:$0]  %s1351, 16, %s7, [#allocation4]
    $region33: #{pkt_loss.1} parent=1 // pred_fallthru
      _
    // Predicated region
    $region34: #{pkt_loss.1} parent=1 // pred_check
      _
    $region35: #{pkt_loss.1} parent=1 // pred_check_branch
      %1355 = sbr.rel (0) target = $region37
    $region36: #{pkt_loss.1} parent=1 // pred_region
      %1356 = dma.done [#allocation4], 16
    $region37: #{pkt_loss.1} parent=1 // pred_fallthru
      _
    %1357 = vsyncpa [#allocation4], 1

</llo_original>
